<compile_context>
chip_gen: v7x
topology: tpu7x:2x2x1
jax: 0.10.0
libtpu: 0.0.40
codegen_flags: <defaults>
</compile_context>

<pallas_src>
import math

import jax
import jax.numpy as jnp
from jax.experimental import pallas as pl
from jax.experimental.pallas import tpu as pltpu


# ----------------------------- Pallas kernel --------------------------------
def upconv_kernel(xt_ref, ah_ref, g_ref, brow_ref, o_ref, t1_ref):
    # xt_ref  : VMEM (1, H, Cin*W)        bf16 input, channels folded into the lane axis
    # ah_ref  : VMEM (2, TH, H)           bf16 row-shifted bilinear H matrices (one per H-tap)
    # g_ref   : VMEM (2*Cin*W, Cout*Wup)  bf16 fused [W-tap-upsample x conv-weight] operand
    # brow_ref: VMEM (1, Cout*Wup)        f32 bias, lane index = co*Wup + j
    # o_ref   : VMEM (1, Cout, TH, Wup)   f32 output block
    # t1_ref  : VMEM (TH, 2*Cin*W)        bf16 scratch, lane index = a*Cin*W + c*W + w
    cinw = xt_ref.shape[2]
    wup = o_ref.shape[3]
    cout = o_ref.shape[1]

    x_mat = xt_ref[0]                                     # (H, Cin*W), hoisted

    # Stage 1: bilinear H-upsampling of both conv H-taps; all input channels batched on the lane
    # axis -> one MXU matmul per tap.  Results go through VMEM scratch to bound vreg pressure.
    for a in range(2):                                    # trip count 2 -- keep unrolled
        t1 = jnp.dot(ah_ref[a], x_mat, preferred_element_type=jnp.float32)   # (TH, Cin*W)
        t1_ref[:, a * cinw:(a + 1) * cinw] = t1.astype(t1_ref.dtype)

    # Stage 2: ONE fused MXU contraction does W-upsampling of both W-taps AND the conv-weight
    # reduction over (h-tap, w-tap, cin):  (TH, 2*Cin*W) @ (2*Cin*W, Cout*Wup).
    acc = jnp.dot(t1_ref[...], g_ref[...], preferred_element_type=jnp.float32)
    acc = acc + brow_ref[...]                             # bias, broadcast over TH sublanes

    # Full (TH, Wup) sublane/lane-dense stores (no masked vst), one per output channel.
    for co in range(cout):                                # trip count Cout (=2) -- unrolled
        o_ref[0, co] = acc[:, co * wup:(co + 1) * wup].astype(o_ref.dtype)


# ------------------------------ glue (setup) ---------------------------------
def _bilinear_matrix(n_in: int, n_out: int) -> jnp.ndarray:
    """Matrix U (n_out x n_in) s.t. U @ v bilinearly upsamples v with align_corners=True."""
    src = jnp.arange(n_out, dtype=jnp.float32) * ((n_in - 1) / (n_out - 1))
    i0 = jnp.clip(jnp.floor(src).astype(jnp.int32), 0, n_in - 1)
    i1 = jnp.clip(i0 + 1, 0, n_in - 1)
    frac = src - i0.astype(jnp.float32)
    rows = jnp.arange(n_out)
    u = jnp.zeros((n_out, n_in), jnp.float32)
    u = u.at[rows, i0].add(1.0 - frac)
    u = u.at[rows, i1].add(frac)
    return u


def _shift_rows(m: jnp.ndarray, d: int) -> jnp.ndarray:
    """Return M' with M'[i] = M[i + d] if in bounds else 0 (zero padding)."""
    n = m.shape[0]
    idx = jnp.arange(n) + d
    valid = (idx >= 0) & (idx < n)
    return jnp.where(valid[:, None], m[jnp.clip(idx, 0, n - 1)], 0.0)


def _pick_tile_h(hup, h, w, cin, cout, wup, budget_bytes):
    """Largest output-row tile TH that divides Hup, satisfies the (8,128) store constraint, and
    whose per-grid-step VMEM estimate (double-buffered blocks + scratch) fits the budget."""
    def est(th):
        bf16, f32 = 2, 4
        xt_blk = h * cin * w * bf16 * 2            # each pipelined block is double-buffered
        ah_blk = 2 * th * h * bf16 * 2
        g_blk = 2 * cin * w * cout * wup * bf16 * 2
        brow_blk = cout * wup * f32 * 2
        out_blk = cout * th * wup * f32 * 2
        scratch = th * 2 * cin * w * bf16
        return xt_blk + ah_blk + g_blk + brow_blk + out_blk + scratch

    cands = [d for d in range(hup, 0, -1) if hup % d == 0 and (d % 8 == 0 or d == hup)]
    for th in cands:
        if est(th) <= budget_bytes:
            return th
    return cands[-1]    # smallest legal tile; explicit rather than a silent fallback


def up_convolution(x, conv_w, conv_b):
    """x: (N, Cin, H, W) f32; conv_w: (Cout, Cin, 2, 2); conv_b: (Cout,).
    Returns (N, Cout, 2H, 2W) f32 = Conv2d(k=2, pad=1, dil=2)(bilinear_2x_align_corners(x)).
    NOTE: MXU matmuls run at default (bf16-operand) precision; max |err| vs a Precision.HIGHEST
    reference is ~1e-2 at unit-scale inputs -- an intentional speed/accuracy trade-off."""
    n, cin, h, w = x.shape
    cout = conv_w.shape[0]
    hup, wup = 2 * h, 2 * w
    assert hup % 8 == 0, "output height must be a multiple of 8"

    # Output-row tile: as large as the VMEM budget allows (fewer grid steps amortize the ~0.35us
    # per-step overhead and keep every matmul large).  Budget is v7x-safe (64 MiB physical VMEM).
    th = _pick_tile_h(hup, h, w, cin, cout, wup, budget_bytes=24 * 1024 * 1024)
    if n == 1 and hup // th == 1 and hup % 16 == 0:
        th = hup // 2     # keep >= 2 parallel grid steps so both v7x TensorCores get work
    ht = hup // th

    uh = _bilinear_matrix(h, hup)            # (Hup, H)
    uw = _bilinear_matrix(w, wup)            # (Wup, W)

    # Conv tap a (resp. b) reads the zero-padded upsampled image at offset 2a-1 (resp. 2b-1);
    # fold that shift into the interpolation matrices.
    ah = jnp.stack([_shift_rows(uh, 2 * a - 1) for a in range(2)])            # (2, Hup, H)
    # Tile-major stacking: ah_r[t*2 + a, i, :] = H-tap a, output row t*th + i.
    ah_r = ah.reshape(2, ht, th, h).transpose(1, 0, 2, 3).reshape(ht * 2, th, h)

    bwt = jnp.stack([_shift_rows(uw, 2 * b - 1).T for b in range(2)])         # (2, W, Wup)
    # Fuse the conv weights into the W-tap matrices (exact f32 at setup, one bf16 rounding):
    #   G[a, c*W + w, co*Wup + j] = sum_b conv_w[co, c, a, b] * bwt[b, w, j]
    g = jnp.einsum("ocab,bwj->acwoj", conv_w.astype(jnp.float32), bwt)
    g = g.reshape(2 * cin * w, cout * wup)
    # TODO(synk): for real UNet channel counts (Cin >= 64) G scales as Cin*Cout*W*Wup; switch to
    # the un-fused tap-scratch formulation ((Cout, Cin*4) weights vs tap stack) + channel chunks.

    brow = jnp.repeat(conv_b.astype(jnp.float32), wup).reshape(1, cout * wup)

    # Fold channels into the lane axis for the channel-batched H-upsample matmul.  bf16 halves
    # HBM->VMEM bytes and block footprints; default-precision MXU feeds bf16 anyway.
    xt = x.transpose(0, 2, 1, 3).reshape(n, h, cin * w).astype(jnp.bfloat16)
    ah_r = ah_r.astype(jnp.bfloat16)
    g = g.astype(jnp.bfloat16)

    # TODO(synk): mark the grid-invariant operands (g, brow; xt varies only with the batch index)
    # with pipeline_mode=pl.Buffered(1) once that matters (large Cin on v7x's 64 MiB VMEM).
    return pl.pallas_call(
        upconv_kernel,
        out_shape=jax.ShapeDtypeStruct((n, cout, hup, wup), jnp.float32),
        grid=(n, ht),
        in_specs=[
            pl.BlockSpec((1, h, cin * w), lambda i, t: (i, 0, 0)),
            pl.BlockSpec((2, th, h), lambda i, t: (t, 0, 0)),
            pl.BlockSpec((2 * cin * w, cout * wup), lambda i, t: (0, 0)),
            pl.BlockSpec((1, cout * wup), lambda i, t: (0, 0)),
        ],
        out_specs=pl.BlockSpec((1, cout, th, wup), lambda i, t: (i, 0, t, 0)),
        scratch_shapes=[pltpu.VMEM((th, 2 * cin * w), jnp.bfloat16)],
        compiler_params=pltpu.CompilerParams(
            dimension_semantics=("parallel", "parallel"),
            vmem_limit_bytes=32 * 1024 * 1024,  # > v5e's 16 MiB default, well under v7x's 64 MiB
        ),
    )(xt, ah_r, g, brow)


# ----------------------------- pure-JAX reference ----------------------------
def _ref_upsample_bilinear_ac(x, hup, wup):
    n, c, h, w = x.shape
    sh = jnp.arange(hup, dtype=jnp.float32) * ((h - 1) / (hup - 1))
    sw = jnp.arange(wup, dtype=jnp.float32) * ((w - 1) / (wup - 1))
    h0 = jnp.clip(jnp.floor(sh).astype(jnp.int32), 0, h - 1)
    h1 = jnp.clip(h0 + 1, 0, h - 1)
    w0 = jnp.clip(jnp.floor(sw).astype(jnp.int32), 0, w - 1)
    w1 = jnp.clip(w0 + 1, 0, w - 1)
    fh = (sh - h0.astype(jnp.float32))[None, None, :, None]
    fw = (sw - w0.astype(jnp.float32))[None, None, None, :]
    x00 = x[:, :, h0][:, :, :, w0]
    x01 = x[:, :, h0][:, :, :, w1]
    x10 = x[:, :, h1][:, :, :, w0]
    x11 = x[:, :, h1][:, :, :, w1]
    return (x00 * (1 - fh) * (1 - fw) + x01 * (1 - fh) * fw
            + x10 * fh * (1 - fw) + x11 * fh * fw)


def _ref_upconvolution(x, conv_w, conv_b):
    n, c, h, w = x.shape
    up = _ref_upsample_bilinear_ac(x, 2 * h, 2 * w)
    out = jax.lax.conv_general_dilated(
        up, conv_w, window_strides=(1, 1), padding=((1, 1), (1, 1)),
        rhs_dilation=(2, 2), dimension_numbers=("NCHW", "OIHW", "NCHW"),
        precision=jax.lax.Precision.HIGHEST)
    return out + conv_b[None, :, None, None]


# ---------------------------------- main --------------------------------------
if __name__ == "__main__":
    N, C, H, W = 2, 4, 64, 64       # input (2, 4, 64, 64) -> output (2, 2, 128, 128)
    COUT = C // 2

    key = jax.random.PRNGKey(0)
    kx, kw, kb = jax.random.split(key, 3)

    x = jax.random.normal(kx, (N, C, H, W), jnp.float32)

    # Deterministic Conv2d-style init (uniform +/- 1/sqrt(fan_in)), fan_in = C*2*2.
    fan_in = C * 2 * 2
    bound = 1.0 / math.sqrt(fan_in)
    conv_w = jax.random.uniform(kw, (COUT, C, 2, 2), jnp.float32, -bound, bound)
    conv_b = jax.random.uniform(kb, (COUT,), jnp.float32, -bound, bound)

    out = up_convolution(x, conv_w, conv_b)
    out = jax.block_until_ready(out)

    ref = _ref_upconvolution(x, conv_w, conv_b)

    assert out.shape == (N, COUT, 2 * H, 2 * W), out.shape
    assert out.dtype == jnp.float32
    # Tolerance covers the bf16-operand MXU path (the kernel deliberately uses default precision;
    # vs the previous 3-cascade version, pre-folding G in f32 removes one bf16 rounding stage).
    err = float(jnp.max(jnp.abs(out - ref)))
    assert jnp.allclose(out, ref, atol=2e-2, rtol=2e-2), err

    print("KERNEL_OK")
</pallas_src>

<mosaic_0001>
module attributes {stable_mosaic.version = 11 : i64} {
  func.func @upconv_kernel(%arg0: i32, %arg1: i32, %arg2: memref<1x64x256xbf16, #tpu.memory_space<vmem>>, %arg3: memref<2x128x64xbf16, #tpu.memory_space<vmem>>, %arg4: memref<512x256xbf16, #tpu.memory_space<vmem>>, %arg5: memref<1x256xf32, #tpu.memory_space<vmem>>, %arg6: memref<1x2x128x128xf32, #tpu.memory_space<vmem>>, %arg7: memref<128x512xbf16, #tpu.memory_space<vmem>>) attributes {dimension_semantics = [#tpu.dimension_semantics<parallel>, #tpu.dimension_semantics<parallel>], iteration_bounds = array<i64: 2, 1>, scalar_prefetch = 0 : i64, scratch_operands = 1 : i64, tpu.core_type = #tpu.core_type<tc>, window_params = [{transform_indices = @transform_0, window_bounds = array<i64: 1, 64, 256>}, {transform_indices = @transform_1, window_bounds = array<i64: 2, 128, 64>}, {pipeline_mode = #tpu.pipeline_mode<synchronous>, transform_indices = @transform_2, window_bounds = array<i64: 512, 256>}, {pipeline_mode = #tpu.pipeline_mode<synchronous>, transform_indices = @transform_3, window_bounds = array<i64: 1, 256>}, {transform_indices = @transform_4, window_bounds = array<i64: 1, 2, 128, 128>}]} {
    %c0 = arith.constant 0 : index
    %c0_0 = arith.constant 0 : index
    %c0_1 = arith.constant 0 : index
    %0 = vector.load %arg2[%c0, %c0_0, %c0_1] : memref<1x64x256xbf16, #tpu.memory_space<vmem>>, vector<1x64x256xbf16>
    %1 = vector.shape_cast %0 : vector<1x64x256xbf16> to vector<64x256xbf16>
    %c0_2 = arith.constant 0 : index
    %c0_3 = arith.constant 0 : index
    %c0_4 = arith.constant 0 : index
    %2 = vector.load %arg3[%c0_2, %c0_3, %c0_4] : memref<2x128x64xbf16, #tpu.memory_space<vmem>>, vector<1x128x64xbf16>
    %3 = vector.shape_cast %2 : vector<1x128x64xbf16> to vector<128x64xbf16>
    %cst = arith.constant dense<0.000000e+00> : vector<128x256xf32>
    %4 = tpu.matmul %3, %1, %cst {dimension_numbers = #tpu.dot_dimension_numbers<[1], [0], [0], [1], [0, 0, 1, 1], [], []>} : vector<128x64xbf16>, vector<64x256xbf16>, vector<128x256xf32> -> vector<128x256xf32>
    %5 = arith.truncf %4 : vector<128x256xf32> to vector<128x256xbf16>
    %c0_5 = arith.constant 0 : index
    %c0_6 = arith.constant 0 : index
    %6 = vector.load %arg7[%c0_5, %c0_6] : memref<128x512xbf16, #tpu.memory_space<vmem>>, vector<128x256xbf16>
    tpu.vector_store %arg7[%c0_5, %c0_6], %5 {strides = array<i32>} : memref<128x512xbf16, #tpu.memory_space<vmem>>, vector<128x256xbf16>,
    %c1 = arith.constant 1 : index
    %c0_7 = arith.constant 0 : index
    %c0_8 = arith.constant 0 : index
    %7 = vector.load %arg3[%c1, %c0_7, %c0_8] : memref<2x128x64xbf16, #tpu.memory_space<vmem>>, vector<1x128x64xbf16>
    %8 = vector.shape_cast %7 : vector<1x128x64xbf16> to vector<128x64xbf16>
    %cst_9 = arith.constant dense<0.000000e+00> : vector<128x256xf32>
    %9 = tpu.matmul %8, %1, %cst_9 {dimension_numbers = #tpu.dot_dimension_numbers<[1], [0], [0], [1], [0, 0, 1, 1], [], []>} : vector<128x64xbf16>, vector<64x256xbf16>, vector<128x256xf32> -> vector<128x256xf32>
    %10 = arith.truncf %9 : vector<128x256xf32> to vector<128x256xbf16>
    %c0_10 = arith.constant 0 : index
    %c256 = arith.constant 256 : index
    %11 = vector.load %arg7[%c0_10, %c256] : memref<128x512xbf16, #tpu.memory_space<vmem>>, vector<128x256xbf16>
    tpu.vector_store %arg7[%c0_10, %c256], %10 {strides = array<i32>} : memref<128x512xbf16, #tpu.memory_space<vmem>>, vector<128x256xbf16>,
    %c0_11 = arith.constant 0 : index
    %c0_12 = arith.constant 0 : index
    %12 = vector.load %arg7[%c0_11, %c0_12] : memref<128x512xbf16, #tpu.memory_space<vmem>>, vector<128x512xbf16>
    %c0_13 = arith.constant 0 : index
    %c0_14 = arith.constant 0 : index
    %13 = vector.load %arg4[%c0_13, %c0_14] : memref<512x256xbf16, #tpu.memory_space<vmem>>, vector<512x256xbf16>
    %cst_15 = arith.constant dense<0.000000e+00> : vector<128x256xf32>
    %14 = tpu.matmul %12, %13, %cst_15 {dimension_numbers = #tpu.dot_dimension_numbers<[1], [0], [0], [1], [0, 0, 1, 1], [], []>} : vector<128x512xbf16>, vector<512x256xbf16>, vector<128x256xf32> -> vector<128x256xf32>
    %c0_16 = arith.constant 0 : index
    %c0_17 = arith.constant 0 : index
    %15 = vector.load %arg5[%c0_16, %c0_17] : memref<1x256xf32, #tpu.memory_space<vmem>>, vector<1x256xf32>
    %16 = vector.broadcast %15 : vector<1x256xf32> to vector<128x256xf32>
    %17 = arith.addf %14, %16 : vector<128x256xf32>
    %18 = vector.extract_strided_slice %17 {offsets = [0, 0], sizes = [128, 128], strides = [1, 1]} : vector<128x256xf32> to vector<128x128xf32>
    %c0_18 = arith.constant 0 : index
    %c0_19 = arith.constant 0 : index
    %c0_20 = arith.constant 0 : index
    %c0_21 = arith.constant 0 : index
    %19 = vector.load %arg6[%c0_18, %c0_19, %c0_20, %c0_21] : memref<1x2x128x128xf32, #tpu.memory_space<vmem>>, vector<1x1x128x128xf32>
    %20 = vector.shape_cast %19 : vector<1x1x128x128xf32> to vector<128x128xf32>
    %21 = vector.shape_cast %18 : vector<128x128xf32> to vector<1x1x128x128xf32>
    tpu.vector_store %arg6[%c0_18, %c0_19, %c0_20, %c0_21], %21 {strides = array<i32>} : memref<1x2x128x128xf32, #tpu.memory_space<vmem>>, vector<1x1x128x128xf32>,
    %22 = vector.extract_strided_slice %17 {offsets = [0, 128], sizes = [128, 128], strides = [1, 1]} : vector<128x256xf32> to vector<128x128xf32>
    %c0_22 = arith.constant 0 : index
    %c1_23 = arith.constant 1 : index
    %c0_24 = arith.constant 0 : index
    %c0_25 = arith.constant 0 : index
    %23 = vector.load %arg6[%c0_22, %c1_23, %c0_24, %c0_25] : memref<1x2x128x128xf32, #tpu.memory_space<vmem>>, vector<1x1x128x128xf32>
    %24 = vector.shape_cast %23 : vector<1x1x128x128xf32> to vector<128x128xf32>
    %25 = vector.shape_cast %22 : vector<128x128xf32> to vector<1x1x128x128xf32>
    tpu.vector_store %arg6[%c0_22, %c1_23, %c0_24, %c0_25], %25 {strides = array<i32>} : memref<1x2x128x128xf32, #tpu.memory_space<vmem>>, vector<1x1x128x128xf32>,
    return
  }
  func.func @transform_0(%arg0: i32, %arg1: i32) -> (i32, i32, i32) {
    %c0_i32 = arith.constant 0 : i32
    %c0_i32_0 = arith.constant 0 : i32
    %c0_i32_1 = arith.constant 0 : i32
    return %arg0, %c0_i32, %c0_i32_0 : i32, i32, i32
  }
  func.func @transform_1(%arg0: i32, %arg1: i32) -> (i32, i32, i32) {
    %c0_i32 = arith.constant 0 : i32
    %c0_i32_0 = arith.constant 0 : i32
    %c0_i32_1 = arith.constant 0 : i32
    return %arg1, %c0_i32, %c0_i32_0 : i32, i32, i32
  }
  func.func @transform_2(%arg0: i32, %arg1: i32) -> (i32, i32) {
    %c0_i32 = arith.constant 0 : i32
    %c0_i32_0 = arith.constant 0 : i32
    %c0_i32_1 = arith.constant 0 : i32
    return %c0_i32, %c0_i32_0 : i32, i32
  }
  func.func @transform_3(%arg0: i32, %arg1: i32) -> (i32, i32) {
    %c0_i32 = arith.constant 0 : i32
    %c0_i32_0 = arith.constant 0 : i32
    %c0_i32_1 = arith.constant 0 : i32
    return %c0_i32, %c0_i32_0 : i32, i32
  }
  func.func @transform_4(%arg0: i32, %arg1: i32) -> (i32, i32, i32, i32) {
    %c0_i32 = arith.constant 0 : i32
    %c0_i32_0 = arith.constant 0 : i32
    %c0_i32_1 = arith.constant 0 : i32
    return %arg0, %c0_i32, %arg1, %c0_i32_0 : i32, i32, i32, i32
  }
}

</mosaic_0001>

<llo_original>
// kernel: tpu_custom_call.1
$region0: #{tpu_custom_call.1}
  #allocation0 [shape = 'u32[]', space=smem, size = 0x4, offset = 0x4, fixed_abs, tag = 'smem constant byte address 0x4 - core index']
  #allocation1 [shape = 'u32[144,128]{1,0:T(1,128)}', space=vmem, size = 0x12000, scoped, tag = 'internal scratch']
  #allocation2 [shape = 'bf16[128,512]{1,0:T(16,128)(2,1)}', space=vmem, size = 0x20000, scoped, tag = 'scratch operand']
  %s0 = inlined_call_operand.vmem [shape: bf16[2,64,256], index: 0, kind: input, shape index: {}]
  %s1 = inlined_call_operand.vmem [shape: bf16[2,128,64], index: 1, kind: input, shape index: {}]
  %s2 = inlined_call_operand.hbm [shape: bf16[512,256], index: 2, kind: input, shape index: {}]
  %s3 = inlined_call_operand.vmem [shape: f32[1,256], index: 3, kind: input, shape index: {}]
  %s4 = inlined_call_operand.hbm [shape: f32[2,2,128,128], index: 4, kind: output, shape index: {}]
  %s5 = sld [smem:[#allocation0]]
  $region53: #{tpu_custom_call.1} parent=0
    _
  %s7 = ssub.s32 1, %s5
  %s8 = scalar_select 0, %s7, %s5
  $region1: #{tpu_custom_call.1} parent=0
    #allocation3 [shape = 'u8[262144]{0}', space=vmem, size = 0x40000, scoped, tag = 'input window, operand 2, single buffered']
    #allocation4 [shape = 's32[2]{0}', space=sflag, size = 0x8, scoped, tag = 'scoped memory for tpu_custom_call.1']
    #allocation5 [shape = 's32[2]{0}', space=sflag, size = 0x8, scoped, tag = 'scoped memory for tpu_custom_call.1']
    #allocation6 [shape = 'u8[262144]{0}', space=vmem, size = 0x40000, scoped, tag = 'output window, operand 0']
    %9 = vsyncpa [#allocation4], 0
    %10 = vsyncpa [#allocation5], 0
    %s11 = scalar_lea.sflag [#allocation5], 1
    %12 = vsyncpa %s11, 0
    loop: start=0, step=1, limit=4
    $region2: #{tpu_custom_call.1} parent=1 // loop_pre_header
      _
    $region3: #{tpu_custom_call.1} parent=1 // loop_header
      %s14 = sphi 0, %s18
      %p15 = scmp.ge.s32.totalorder %s14, 4
      %s21 = sphi 0, %s33
      %s22 = sphi 0, %s29
      %s23 = sphi 0, %s21
      %s24 = sphi 0, %s22
      %s25 = sphi 0, %s23
      %s26 = sphi 0, %s24
      %s36 = sphi 0, %s38
      %s39 = sphi 0, %s36
      %s40 = sphi 0, %s39
      %s56 = sphi 0, %s40
      %s62 = sphi 0, %s64
      %s65 = sphi 0, %s62
      %s66 = sphi 0, %s65
      %s82 = sphi 0, %s66
      %s86 = sphi 0, %s86
      %s88 = sphi 0, %s86
      %s89 = sphi 0, %s88
      %s103 = sphi 0, %s89
      %s107 = sphi 0, %s107
      %s109 = sphi 0, %s107
      %s110 = sphi 0, %s109
      %s124 = sphi 0, %s110
      %s132 = sphi 0, %s134
      %s135 = sphi 0, %s132
      %s136 = sphi 0, %s135
      %s152 = sphi 0, %s136
    $region4: #{tpu_custom_call.1} parent=1 // loop_header_branch
      %17 = sbr.rel (%p15) target = $region8
    $region5: #{tpu_custom_call.1} parent=1 // loop_body
      %s19 = ssub.s32 %s14, 1
      %s20 = ssub.s32 %s14, 2
      %s27 = sadd.s32 1, %s22
      %p28 = scmp.ge.s32.totalorder %s27, 1
      %s29 = scalar_select %p28, 0, %s27
      %s30 = sadd.s32 1, %s21
      %s31 = scalar_select %p28, %s30, %s21
      %p32 = scmp.ge.s32.totalorder %s31, 2
      %s33 = scalar_select %p32, 0, %s31
      %s34 = ssub.s32 %s21, %s33
      %p35 = scmp.eq.s32.totalorder %s34, 0
      %s37 = sadd.s32 %s36, 1
      %s38 = scalar_select %p35, %s36, %s37
      %p41 = pneg %p35
      %p42 = scmp.eq.s32.totalorder %s14, 1
      %p43 = por %p41, %p42
      %p44 = scmp.ne.s32.totalorder %s36, %s39
      %p45 = scmp.eq.s32.totalorder %s14, 0
      %p46 = por %p44, %p45
      %p47 = scmp.ne.s32.totalorder %s36, %s39
      %p48 = scmp.eq.s32.totalorder %s19, 1
      %p49 = por %p47, %p48
      %p50 = scmp.ne.s32.totalorder %s39, %s40
      %p51 = scmp.eq.s32.totalorder %s19, 0
      %p52 = por %p50, %p51
      %p53 = scmp.ne.s32.totalorder %s39, %s40
      %p54 = scmp.eq.s32.totalorder %s20, 1
      %p55 = por %p53, %p54
      %p57 = scmp.ne.s32.totalorder %s40, %s56
      %p58 = scmp.eq.s32.totalorder %s20, 0
      %p59 = por %p57, %p58
      %s60 = ssub.s32 %s22, %s29
      %p61 = scmp.eq.s32.totalorder %s60, 0
      %s63 = sadd.s32 %s62, 1
      %s64 = scalar_select %p61, %s62, %s63
      %p67 = pneg %p61
      %p68 = scmp.eq.s32.totalorder %s14, 1
      %p69 = por %p67, %p68
      %p70 = scmp.ne.s32.totalorder %s62, %s65
      %p71 = scmp.eq.s32.totalorder %s14, 0
      %p72 = por %p70, %p71
      %p73 = scmp.ne.s32.totalorder %s62, %s65
      %p74 = scmp.eq.s32.totalorder %s19, 1
      %p75 = por %p73, %p74
      %p76 = scmp.ne.s32.totalorder %s65, %s66
      %p77 = scmp.eq.s32.totalorder %s19, 0
      %p78 = por %p76, %p77
      %p79 = scmp.ne.s32.totalorder %s65, %s66
      %p80 = scmp.eq.s32.totalorder %s20, 1
      %p81 = por %p79, %p80
      %p83 = scmp.ne.s32.totalorder %s66, %s82
      %p84 = scmp.eq.s32.totalorder %s20, 0
      %p85 = por %p83, %p84
      %s87 = sadd.s32 %s86, 1
      %p90 = scmp.eq.s32.totalorder %s14, 1
      %p91 = scmp.ne.s32.totalorder %s86, %s88
      %p92 = scmp.eq.s32.totalorder %s14, 0
      %p93 = por %p91, %p92
      %p94 = scmp.ne.s32.totalorder %s86, %s88
      %p95 = scmp.eq.s32.totalorder %s19, 1
      %p96 = por %p94, %p95
      %p97 = scmp.ne.s32.totalorder %s88, %s89
      %p98 = scmp.eq.s32.totalorder %s19, 0
      %p99 = por %p97, %p98
      %p100 = scmp.ne.s32.totalorder %s88, %s89
      %p101 = scmp.eq.s32.totalorder %s20, 1
      %p102 = por %p100, %p101
      %p104 = scmp.ne.s32.totalorder %s89, %s103
      %p105 = scmp.eq.s32.totalorder %s20, 0
      %p106 = por %p104, %p105
      %s108 = sadd.s32 %s107, 1
      %p111 = scmp.eq.s32.totalorder %s14, 1
      %p112 = scmp.ne.s32.totalorder %s107, %s109
      %p113 = scmp.eq.s32.totalorder %s14, 0
      %p114 = por %p112, %p113
      %p115 = scmp.ne.s32.totalorder %s107, %s109
      %p116 = scmp.eq.s32.totalorder %s19, 1
      %p117 = por %p115, %p116
      %p118 = scmp.ne.s32.totalorder %s109, %s110
      %p119 = scmp.eq.s32.totalorder %s19, 0
      %p120 = por %p118, %p119
      %p121 = scmp.ne.s32.totalorder %s109, %s110
      %p122 = scmp.eq.s32.totalorder %s20, 1
      %p123 = por %p121, %p122
      %p125 = scmp.ne.s32.totalorder %s110, %s124
      %p126 = scmp.eq.s32.totalorder %s20, 0
      %p127 = por %p125, %p126
      %s128 = ssub.s32 %s21, %s33
      %s129 = ssub.s32 %s22, %s29
      %s130 = sor.u32 %s128, %s129
      %p131 = scmp.eq.s32.totalorder %s130, 0
      %s133 = sadd.s32 %s132, 1
      %s134 = scalar_select %p131, %s132, %s133
      %p137 = pneg %p131
      %p138 = scmp.eq.s32.totalorder %s14, 1
      %p139 = por %p137, %p138
      %p140 = scmp.ne.s32.totalorder %s132, %s135
      %p141 = scmp.eq.s32.totalorder %s14, 0
      %p142 = por %p140, %p141
      %p143 = scmp.ne.s32.totalorder %s132, %s135
      %p144 = scmp.eq.s32.totalorder %s19, 1
      %p145 = por %p143, %p144
      %p146 = scmp.ne.s32.totalorder %s135, %s136
      %p147 = scmp.eq.s32.totalorder %s19, 0
      %p148 = por %p146, %p147
      %p149 = scmp.ne.s32.totalorder %s135, %s136
      %p150 = scmp.eq.s32.totalorder %s20, 1
      %p151 = por %p149, %p150
      %p153 = scmp.ne.s32.totalorder %s136, %s152
      %p154 = scmp.eq.s32.totalorder %s20, 0
      %p155 = por %p153, %p154
      %p156 = scmp.le.s32.totalorder 1, %s14
      %p157 = scmp.lt.s32.totalorder %s14, 3
      %p158 = pnand %p156, %p157
      %p159 = pneg %p158
      // Predicated region
      $region9: #{tpu_custom_call.1} parent=5 // pred_check
        _
      $region10: #{tpu_custom_call.1} parent=5 // pred_check_branch
        %161 = sbr.rel (%p158) target = $region12
      $region11: #{tpu_custom_call.1} parent=5 // pred_region
        %s162 = ssub.s32 %s14, 1
        // Predicated region
        $region13: #{tpu_custom_call.1} parent=11 // pred_check
          %p163 = pneg %p78
        $region14: #{tpu_custom_call.1} parent=11 // pred_check_branch
          %165 = sbr.rel (%p163) target = $region16
        $region15: #{tpu_custom_call.1} parent=11 // pred_region
          %s166 = smul.u32 2, %s24
          %p167 = scmp.lt.s32.totalorder %s166, 1
          %s168 = scalar_select %p167, %s166, 1
          %s169 = smul.addr %s168, 16
          %s170 = smul.addr %s169, 4
          %s171 = scalar_lea.vmem %s1, %s170
          %s172 = smul.u32 2, %s24
        $region16: #{tpu_custom_call.1} parent=11 // pred_fallthru
          _
        // Predicated region
        $region17: #{tpu_custom_call.1} parent=11 // pred_check
          %p173 = pneg %p99
        $region18: #{tpu_custom_call.1} parent=11 // pred_check_branch
          %175 = sbr.rel (%p173) target = $region20
        $region19: #{tpu_custom_call.1} parent=11 // pred_region
          %s177 = ssub.s32 8192, 8192
          %178 = vsyncadd [#allocation4], %s177
          %s179 = sshll.u32 [#allocation3], 4
          %s180 = int_to_ptr.vmem [resolvable:$true] %s179
          %185 = dma.hbm_to_vmem [thread:$0]  %s2, 8192, %s180, [#allocation4], 128, 128, 8
        $region20: #{tpu_custom_call.1} parent=11 // pred_fallthru
          _
        // Predicated region
        $region21: #{tpu_custom_call.1} parent=11 // pred_check
          %p186 = pneg %p120
        $region22: #{tpu_custom_call.1} parent=11 // pred_check_branch
          %188 = sbr.rel (%p186) target = $region24
        $region23: #{tpu_custom_call.1} parent=11 // pred_region
          _
        $region24: #{tpu_custom_call.1} parent=11 // pred_fallthru
          _
      $region12: #{tpu_custom_call.1} parent=5 // pred_fallthru
        _
      %p189 = scmp.lt.s32.totalorder %s14, 2
      // Predicated region
      $region25: #{tpu_custom_call.1} parent=5 // pred_check
        %p190 = pneg %p189
      $region26: #{tpu_custom_call.1} parent=5 // pred_check_branch
        %192 = sbr.rel (%p190) target = $region28
      $region27: #{tpu_custom_call.1} parent=5 // pred_region
        // Predicated region
        $region29: #{tpu_custom_call.1} parent=27 // pred_check
          %p193 = pneg %p46
        $region30: #{tpu_custom_call.1} parent=27 // pred_check_branch
          %195 = sbr.rel (%p193) target = $region32
        $region31: #{tpu_custom_call.1} parent=27 // pred_region
          %p196 = scmp.lt.s32.totalorder %s21, 1
          %s197 = scalar_select %p196, %s21, 1
          %s198 = smul.addr %s197, 16
          %s199 = smul.addr %s198, 4
          %s200 = scalar_lea.vmem %s0, %s199
        $region32: #{tpu_custom_call.1} parent=27 // pred_fallthru
          _
      $region28: #{tpu_custom_call.1} parent=5 // pred_fallthru
        _
      %p201 = scmp.le.s32.totalorder 1, %s14
      %p202 = scmp.lt.s32.totalorder %s14, 3
      %p203 = pnand %p201, %p202
      %p204 = pneg %p203
      // Predicated region
      $region33: #{tpu_custom_call.1} parent=5 // pred_check
        _
      $region34: #{tpu_custom_call.1} parent=5 // pred_check_branch
        %206 = sbr.rel (%p203) target = $region36
      $region35: #{tpu_custom_call.1} parent=5 // pred_region
        %s207 = ssub.s32 %s14, 1
        // Predicated region
        $region37: #{tpu_custom_call.1} parent=35 // pred_check
          %p208 = pneg %p99
        $region38: #{tpu_custom_call.1} parent=35 // pred_check_branch
          %210 = sbr.rel (%p208) target = $region40
        $region39: #{tpu_custom_call.1} parent=35 // pred_region
          %211 = dma.done [#allocation4], 8192
        $region40: #{tpu_custom_call.1} parent=35 // pred_fallthru
          _
        %p212 = scmp.lt.s32.totalorder %s23, 1
        %s213 = scalar_select %p212, %s23, 1
        %s214 = smul.addr %s213, 16
        %s215 = smul.addr %s214, 4
        %s216 = scalar_lea.vmem %s0, %s215
        %p217 = pneg %p52
        %p218 = pneg %p49
        %s219 = smul.u32 2, %s24
        %p220 = scmp.lt.s32.totalorder %s219, 1
        %s221 = scalar_select %p220, %s219, 1
        %s222 = smul.addr %s221, 16
        %s223 = smul.addr %s222, 4
        %s224 = scalar_lea.vmem %s1, %s223
        %p225 = pneg %p78
        %p226 = pneg %p75
        %p227 = pneg %p99
        %p228 = pneg %p96
        %p229 = pneg %p120
        %p230 = pneg %p117
        %p231 = pneg %p148
        %p232 = pneg %p145
        %s233 = sand.u32 %s135, 1
        %s234 = scalar_lea.sflag [#allocation5], %s233
        %s235 = sand.u32 %s135, 1
        %s236 = smul.addr %s235, 256
        %s237 = scalar_lea.vmem [#allocation6], %s236
        %p238 = scmp.lt.s32.totalorder %s23, 1
        %s239 = scalar_select %p238, %s23, 1
        %s240 = smul.addr %s239, 16
        %s241 = smul.addr %s240, 4
        %s242 = scalar_lea.vmem %s0, %s241
        %s243 = smul.u32 2, %s24
        %p244 = scmp.lt.s32.totalorder %s243, 1
        %s245 = scalar_select %p244, %s243, 1
        %s246 = smul.addr %s245, 16
        %s247 = smul.addr %s246, 4
        %s248 = scalar_lea.vmem %s1, %s247
        %s249 = smul.u32 2, %s24
        %s250 = smul.u32 16, %s24
        %v252 = vld [vmem:[%s242] sm:$0xff]
        %v253 = vld [vmem:[%s242 + $0x8] sm:$0xff]
        %v254 = vld [vmem:[%s242 + $0x10] sm:$0xff]
        %v255 = vld [vmem:[%s242 + $0x18] sm:$0xff]
        %v256 = vld [vmem:[%s242 + $0x20] sm:$0xff]
        %v257 = vld [vmem:[%s242 + $0x28] sm:$0xff]
        %v258 = vld [vmem:[%s242 + $0x30] sm:$0xff]
        %v259 = vld [vmem:[%s242 + $0x38] sm:$0xff]
        %v260 = vld [vmem:[%s248] sm:$0xf]
        %v261 = vld [vmem:[%s248 + $0x4] sm:$0xf]
        %v262 = vld [vmem:[%s248 + $0x8] sm:$0xf]
        %v263 = vld [vmem:[%s248 + $0xc] sm:$0xf]
        %v264 = vld [vmem:[%s248 + $0x10] sm:$0xf]
        %v265 = vld [vmem:[%s248 + $0x14] sm:$0xf]
        %v266 = vld [vmem:[%s248 + $0x18] sm:$0xf]
        %v267 = vld [vmem:[%s248 + $0x1c] sm:$0xf]
        %v268 = vld [vmem:[%s248 + $0x20] sm:$0xf]
        %v269 = vld [vmem:[%s248 + $0x24] sm:$0xf]
        %v270 = vld [vmem:[%s248 + $0x28] sm:$0xf]
        %v271 = vld [vmem:[%s248 + $0x2c] sm:$0xf]
        %v272 = vld [vmem:[%s248 + $0x30] sm:$0xf]
        %v273 = vld [vmem:[%s248 + $0x34] sm:$0xf]
        %v274 = vld [vmem:[%s248 + $0x38] sm:$0xf]
        %v275 = vld [vmem:[%s248 + $0x3c] sm:$0xf]
        %v292 = vunpack.c.l.b16 %v260
        %v293 = vunpack.c.l.b16 %v261
        %v294 = vunpack.c.l.b16 %v262
        %v295 = vunpack.c.l.b16 %v263
        %v296 = vunpack.c.l.b16 %v264
        %v297 = vunpack.c.l.b16 %v265
        %v298 = vunpack.c.l.b16 %v266
        %v299 = vunpack.c.l.b16 %v267
        %v300 = vunpack.c.l.b16 %v268
        %v301 = vunpack.c.l.b16 %v269
        %v302 = vunpack.c.l.b16 %v270
        %v303 = vunpack.c.l.b16 %v271
        %v304 = vunpack.c.l.b16 %v272
        %v305 = vunpack.c.l.b16 %v273
        %v306 = vunpack.c.l.b16 %v274
        %v307 = vunpack.c.l.b16 %v275
        %v308 = vpack.c.b16 %v293, %v292
        %v309 = vpack.c.b16 %v295, %v294
        %v310 = vpack.c.b16 %v297, %v296
        %v311 = vpack.c.b16 %v299, %v298
        %v312 = vpack.c.b16 %v301, %v300
        %v313 = vpack.c.b16 %v303, %v302
        %v314 = vpack.c.b16 %v305, %v304
        %v315 = vpack.c.b16 %v307, %v306
        %v324 = vunpack.c.l.b16 %v252
        %v325 = vunpack.c.h.b16 %v252
        %v326 = vunpack.c.l.b16 %v253
        %v327 = vunpack.c.h.b16 %v253
        %v328 = vunpack.c.l.b16 %v254
        %v329 = vunpack.c.h.b16 %v254
        %v330 = vunpack.c.l.b16 %v255
        %v331 = vunpack.c.h.b16 %v255
        %v332 = vunpack.c.l.b16 %v256
        %v333 = vunpack.c.h.b16 %v256
        %v334 = vunpack.c.l.b16 %v257
        %v335 = vunpack.c.h.b16 %v257
        %v336 = vunpack.c.l.b16 %v258
        %v337 = vunpack.c.h.b16 %v258
        %v338 = vunpack.c.l.b16 %v259
        %v339 = vunpack.c.h.b16 %v259
        %v340 = vpack.c.b16 %v326, %v324
        %v341 = vpack.c.b16 %v327, %v325
        %v342 = vpack.c.b16 %v330, %v328
        %v343 = vpack.c.b16 %v331, %v329
        %v344 = vpack.c.b16 %v334, %v332
        %v345 = vpack.c.b16 %v335, %v333
        %v346 = vpack.c.b16 %v338, %v336
        %v347 = vpack.c.b16 %v339, %v337
        %vm356 = vcmask 523264
        %v358 = vsel %vm356, %v308, 0
        %v361 = vsel %vm356, %v309, 0
        %v364 = vsel %vm356, %v310, 0
        %v367 = vsel %vm356, %v311, 0
        %v370 = vsel %vm356, %v312, 0
        %v373 = vsel %vm356, %v313, 0
        %v376 = vsel %vm356, %v314, 0
        %v379 = vsel %vm356, %v315, 0
        %381 = vmatprep.subr.bf16.mxu0 %v341
        %382 = vmatpush1.bf16.msra.mxu0 %v340
        %383 = vmatprep.subr.bf16.mxu0 %v343
        %384 = vmatpush1.bf16.msra.mxu0 %v342
        %385 = vmatprep.subr.bf16.mxu0 %v345
        %386 = vmatpush1.bf16.msra.mxu0 %v344
        %387 = vmatprep.subr.bf16.mxu0 %v347
        %388 = vmatpush1.bf16.msra.mxu0 %v346
        %389 = vmatprep.subr.bf16.mxu0 0
        %390 = vmatpush1.bf16.msra.mxu0 0
        %391 = vmatprep.subr.bf16.mxu0 0
        %392 = vmatpush1.bf16.msra.mxu0 0
        %393 = vmatprep.subr.bf16.mxu0 0
        %394 = vmatpush1.bf16.msra.mxu0 0
        %395 = vmatprep.subr.bf16.mxu0 0
        %396 = vmatpush1.bf16.msra.mxu0 0
        %397 = vmatprep.subr.bf16.mxu0 0
        %398 = vmatpush1.bf16.msra.mxu0 0
        %399 = vmatprep.subr.bf16.mxu0 0
        %400 = vmatpush1.bf16.msra.mxu0 0
        %401 = vmatprep.subr.bf16.mxu0 0
        %402 = vmatpush1.bf16.msra.mxu0 0
        %403 = vmatprep.subr.bf16.mxu0 0
        %404 = vmatpush1.bf16.msra.mxu0 0
        %405 = vmatprep.subr.bf16.mxu0 0
        %406 = vmatpush1.bf16.msra.mxu0 0
        %407 = vmatprep.subr.bf16.mxu0 0
        %408 = vmatpush1.bf16.msra.mxu0 0
        %409 = vmatprep.subr.bf16.mxu0 0
        %410 = vmatpush1.bf16.msra.mxu0 0
        %411 = vmatprep.subr.bf16.mxu0 0
        %412 = vmatpush1.bf16.msra.mxu0 0
        %413 = vmatprep.mubr.bf16.mxu0 0
        %414 = vmatmul.mubr.bf16.gmra.mrb[0].mxu0 %v358
        %v415 = vpop.f32.mrb[0].mxu0
        %v416 = vadd.f32 0.0, %v415
        %v417 = vpop.f32.mrb[0].mxu0
        %v418 = vadd.f32 0.0, %v417
        %v419 = vpop.f32.mrb[0].mxu0
        %v420 = vadd.f32 0.0, %v419
        %v421 = vpop.f32.mrb[0].mxu0
        %v422 = vadd.f32 0.0, %v421
        %423 = vmatprep.mubr.bf16.mxu0 0
        %424 = vmatmul.mubr.bf16.gmra.mrb[0].mxu0 %v361
        %v425 = vpop.f32.mrb[0].mxu0
        %v426 = vadd.f32 0.0, %v425
        %v427 = vpop.f32.mrb[0].mxu0
        %v428 = vadd.f32 0.0, %v427
        %v429 = vpop.f32.mrb[0].mxu0
        %v430 = vadd.f32 0.0, %v429
        %v431 = vpop.f32.mrb[0].mxu0
        %v432 = vadd.f32 0.0, %v431
        %433 = vmatprep.mubr.bf16.mxu0 0
        %434 = vmatmul.mubr.bf16.gmra.mrb[0].mxu0 %v364
        %v435 = vpop.f32.mrb[0].mxu0
        %v436 = vadd.f32 0.0, %v435
        %v437 = vpop.f32.mrb[0].mxu0
        %v438 = vadd.f32 0.0, %v437
        %v439 = vpop.f32.mrb[0].mxu0
        %v440 = vadd.f32 0.0, %v439
        %v441 = vpop.f32.mrb[0].mxu0
        %v442 = vadd.f32 0.0, %v441
        %443 = vmatprep.mubr.bf16.mxu0 0
        %444 = vmatmul.mubr.bf16.gmra.mrb[0].mxu0 %v367
        %v445 = vpop.f32.mrb[0].mxu0
        %v446 = vadd.f32 0.0, %v445
        %v447 = vpop.f32.mrb[0].mxu0
        %v448 = vadd.f32 0.0, %v447
        %v449 = vpop.f32.mrb[0].mxu0
        %v450 = vadd.f32 0.0, %v449
        %v451 = vpop.f32.mrb[0].mxu0
        %v452 = vadd.f32 0.0, %v451
        %453 = vmatprep.mubr.bf16.mxu0 0
        %454 = vmatmul.mubr.bf16.gmra.mrb[0].mxu0 %v370
        %v455 = vpop.f32.mrb[0].mxu0
        %v456 = vadd.f32 0.0, %v455
        %v457 = vpop.f32.mrb[0].mxu0
        %v458 = vadd.f32 0.0, %v457
        %v459 = vpop.f32.mrb[0].mxu0
        %v460 = vadd.f32 0.0, %v459
        %v461 = vpop.f32.mrb[0].mxu0
        %v462 = vadd.f32 0.0, %v461
        %463 = vmatprep.mubr.bf16.mxu0 0
        %464 = vmatmul.mubr.bf16.gmra.mrb[0].mxu0 %v373
        %v465 = vpop.f32.mrb[0].mxu0
        %v466 = vadd.f32 0.0, %v465
        %v467 = vpop.f32.mrb[0].mxu0
        %v468 = vadd.f32 0.0, %v467
        %v469 = vpop.f32.mrb[0].mxu0
        %v470 = vadd.f32 0.0, %v469
        %v471 = vpop.f32.mrb[0].mxu0
        %v472 = vadd.f32 0.0, %v471
        %473 = vmatprep.mubr.bf16.mxu0 0
        %474 = vmatmul.mubr.bf16.gmra.mrb[0].mxu0 %v376
        %v475 = vpop.f32.mrb[0].mxu0
        %v476 = vadd.f32 0.0, %v475
        %v477 = vpop.f32.mrb[0].mxu0
        %v478 = vadd.f32 0.0, %v477
        %v479 = vpop.f32.mrb[0].mxu0
        %v480 = vadd.f32 0.0, %v479
        %v481 = vpop.f32.mrb[0].mxu0
        %v482 = vadd.f32 0.0, %v481
        %483 = vmatprep.mubr.bf16.mxu0 0
        %484 = vmatmul.mubr.bf16.gmra.mrb[0].mxu0 %v379
        %v485 = vpop.f32.mrb[0].mxu0
        %v486 = vadd.f32 0.0, %v485
        %v487 = vpop.f32.mrb[0].mxu0
        %v488 = vadd.f32 0.0, %v487
        %v489 = vpop.f32.mrb[0].mxu0
        %v490 = vadd.f32 0.0, %v489
        %v491 = vpop.f32.mrb[0].mxu0
        %v492 = vadd.f32 0.0, %v491
        %493 = vdwg.mxu0
        %v494 = vpack.c.bf16 %v420, %v416
        %v495 = vpack.c.bf16 %v422, %v418
        %v496 = vpack.c.bf16 %v430, %v426
        %v497 = vpack.c.bf16 %v432, %v428
        %v498 = vpack.c.bf16 %v440, %v436
        %v499 = vpack.c.bf16 %v442, %v438
        %v500 = vpack.c.bf16 %v450, %v446
        %v501 = vpack.c.bf16 %v452, %v448
        %v502 = vpack.c.bf16 %v460, %v456
        %v503 = vpack.c.bf16 %v462, %v458
        %v504 = vpack.c.bf16 %v470, %v466
        %v505 = vpack.c.bf16 %v472, %v468
        %v506 = vpack.c.bf16 %v480, %v476
        %v507 = vpack.c.bf16 %v482, %v478
        %v508 = vpack.c.bf16 %v490, %v486
        %v509 = vpack.c.bf16 %v492, %v488
        %510 = vst [vmem:[#allocation2] sm:$0xff] %v494
        %511 = vst [vmem:[#allocation2 + $0x8] sm:$0xff] %v495
        %512 = vst [vmem:[#allocation2 + $0x20] sm:$0xff] %v496
        %513 = vst [vmem:[#allocation2 + $0x28] sm:$0xff] %v497
        %514 = vst [vmem:[#allocation2 + $0x40] sm:$0xff] %v498
        %515 = vst [vmem:[#allocation2 + $0x48] sm:$0xff] %v499
        %516 = vst [vmem:[#allocation2 + $0x60] sm:$0xff] %v500
        %517 = vst [vmem:[#allocation2 + $0x68] sm:$0xff] %v501
        %518 = vst [vmem:[#allocation2 + $0x80] sm:$0xff] %v502
        %519 = vst [vmem:[#allocation2 + $0x88] sm:$0xff] %v503
        %520 = vst [vmem:[#allocation2 + $0xa0] sm:$0xff] %v504
        %521 = vst [vmem:[#allocation2 + $0xa8] sm:$0xff] %v505
        %522 = vst [vmem:[#allocation2 + $0xc0] sm:$0xff] %v506
        %523 = vst [vmem:[#allocation2 + $0xc8] sm:$0xff] %v507
        %524 = vst [vmem:[#allocation2 + $0xe0] sm:$0xff] %v508
        %525 = vst [vmem:[#allocation2 + $0xe8] sm:$0xff] %v509
        %s526 = scalar_lea.vmem %s248, 64
        %v527 = vld [vmem:[%s526] sm:$0xf]
        %v528 = vld [vmem:[%s526 + $0x4] sm:$0xf]
        %v529 = vld [vmem:[%s526 + $0x8] sm:$0xf]
        %v530 = vld [vmem:[%s526 + $0xc] sm:$0xf]
        %v531 = vld [vmem:[%s526 + $0x10] sm:$0xf]
        %v532 = vld [vmem:[%s526 + $0x14] sm:$0xf]
        %v533 = vld [vmem:[%s526 + $0x18] sm:$0xf]
        %v534 = vld [vmem:[%s526 + $0x1c] sm:$0xf]
        %v535 = vld [vmem:[%s526 + $0x20] sm:$0xf]
        %v536 = vld [vmem:[%s526 + $0x24] sm:$0xf]
        %v537 = vld [vmem:[%s526 + $0x28] sm:$0xf]
        %v538 = vld [vmem:[%s526 + $0x2c] sm:$0xf]
        %v539 = vld [vmem:[%s526 + $0x30] sm:$0xf]
        %v540 = vld [vmem:[%s526 + $0x34] sm:$0xf]
        %v541 = vld [vmem:[%s526 + $0x38] sm:$0xf]
        %v542 = vld [vmem:[%s526 + $0x3c] sm:$0xf]
        %v559 = vunpack.c.l.b16 %v527
        %v560 = vunpack.c.l.b16 %v528
        %v561 = vunpack.c.l.b16 %v529
        %v562 = vunpack.c.l.b16 %v530
        %v563 = vunpack.c.l.b16 %v531
        %v564 = vunpack.c.l.b16 %v532
        %v565 = vunpack.c.l.b16 %v533
        %v566 = vunpack.c.l.b16 %v534
        %v567 = vunpack.c.l.b16 %v535
        %v568 = vunpack.c.l.b16 %v536
        %v569 = vunpack.c.l.b16 %v537
        %v570 = vunpack.c.l.b16 %v538
        %v571 = vunpack.c.l.b16 %v539
        %v572 = vunpack.c.l.b16 %v540
        %v573 = vunpack.c.l.b16 %v541
        %v574 = vunpack.c.l.b16 %v542
        %v575 = vpack.c.b16 %v560, %v559
        %v576 = vpack.c.b16 %v562, %v561
        %v577 = vpack.c.b16 %v564, %v563
        %v578 = vpack.c.b16 %v566, %v565
        %v579 = vpack.c.b16 %v568, %v567
        %v580 = vpack.c.b16 %v570, %v569
        %v581 = vpack.c.b16 %v572, %v571
        %v582 = vpack.c.b16 %v574, %v573
        %v584 = vsel %vm356, %v575, 0
        %v587 = vsel %vm356, %v576, 0
        %v590 = vsel %vm356, %v577, 0
        %v593 = vsel %vm356, %v578, 0
        %v596 = vsel %vm356, %v579, 0
        %v599 = vsel %vm356, %v580, 0
        %v602 = vsel %vm356, %v581, 0
        %v605 = vsel %vm356, %v582, 0
        %607 = vmatprep.subr.bf16.mxu0 %v341
        %608 = vmatpush1.bf16.msra.mxu0 %v340
        %609 = vmatprep.subr.bf16.mxu0 %v343
        %610 = vmatpush1.bf16.msra.mxu0 %v342
        %611 = vmatprep.subr.bf16.mxu0 %v345
        %612 = vmatpush1.bf16.msra.mxu0 %v344
        %613 = vmatprep.subr.bf16.mxu0 %v347
        %614 = vmatpush1.bf16.msra.mxu0 %v346
        %615 = vmatprep.subr.bf16.mxu0 0
        %616 = vmatpush1.bf16.msra.mxu0 0
        %617 = vmatprep.subr.bf16.mxu0 0
        %618 = vmatpush1.bf16.msra.mxu0 0
        %619 = vmatprep.subr.bf16.mxu0 0
        %620 = vmatpush1.bf16.msra.mxu0 0
        %621 = vmatprep.subr.bf16.mxu0 0
        %622 = vmatpush1.bf16.msra.mxu0 0
        %623 = vmatprep.subr.bf16.mxu0 0
        %624 = vmatpush1.bf16.msra.mxu0 0
        %625 = vmatprep.subr.bf16.mxu0 0
        %626 = vmatpush1.bf16.msra.mxu0 0
        %627 = vmatprep.subr.bf16.mxu0 0
        %628 = vmatpush1.bf16.msra.mxu0 0
        %629 = vmatprep.subr.bf16.mxu0 0
        %630 = vmatpush1.bf16.msra.mxu0 0
        %631 = vmatprep.subr.bf16.mxu0 0
        %632 = vmatpush1.bf16.msra.mxu0 0
        %633 = vmatprep.subr.bf16.mxu0 0
        %634 = vmatpush1.bf16.msra.mxu0 0
        %635 = vmatprep.subr.bf16.mxu0 0
        %636 = vmatpush1.bf16.msra.mxu0 0
        %637 = vmatprep.subr.bf16.mxu0 0
        %638 = vmatpush1.bf16.msra.mxu0 0
        %639 = vmatprep.mubr.bf16.mxu0 0
        %640 = vmatmul.mubr.bf16.gmra.mrb[0].mxu0 %v584
        %v641 = vpop.f32.mrb[0].mxu0
        %v642 = vadd.f32 0.0, %v641
        %v643 = vpop.f32.mrb[0].mxu0
        %v644 = vadd.f32 0.0, %v643
        %v645 = vpop.f32.mrb[0].mxu0
        %v646 = vadd.f32 0.0, %v645
        %v647 = vpop.f32.mrb[0].mxu0
        %v648 = vadd.f32 0.0, %v647
        %649 = vmatprep.mubr.bf16.mxu0 0
        %650 = vmatmul.mubr.bf16.gmra.mrb[0].mxu0 %v587
        %v651 = vpop.f32.mrb[0].mxu0
        %v652 = vadd.f32 0.0, %v651
        %v653 = vpop.f32.mrb[0].mxu0
        %v654 = vadd.f32 0.0, %v653
        %v655 = vpop.f32.mrb[0].mxu0
        %v656 = vadd.f32 0.0, %v655
        %v657 = vpop.f32.mrb[0].mxu0
        %v658 = vadd.f32 0.0, %v657
        %659 = vmatprep.mubr.bf16.mxu0 0
        %660 = vmatmul.mubr.bf16.gmra.mrb[0].mxu0 %v590
        %v661 = vpop.f32.mrb[0].mxu0
        %v662 = vadd.f32 0.0, %v661
        %v663 = vpop.f32.mrb[0].mxu0
        %v664 = vadd.f32 0.0, %v663
        %v665 = vpop.f32.mrb[0].mxu0
        %v666 = vadd.f32 0.0, %v665
        %v667 = vpop.f32.mrb[0].mxu0
        %v668 = vadd.f32 0.0, %v667
        %669 = vmatprep.mubr.bf16.mxu0 0
        %670 = vmatmul.mubr.bf16.gmra.mrb[0].mxu0 %v593
        %v671 = vpop.f32.mrb[0].mxu0
        %v672 = vadd.f32 0.0, %v671
        %v673 = vpop.f32.mrb[0].mxu0
        %v674 = vadd.f32 0.0, %v673
        %v675 = vpop.f32.mrb[0].mxu0
        %v676 = vadd.f32 0.0, %v675
        %v677 = vpop.f32.mrb[0].mxu0
        %v678 = vadd.f32 0.0, %v677
        %679 = vmatprep.mubr.bf16.mxu0 0
        %680 = vmatmul.mubr.bf16.gmra.mrb[0].mxu0 %v596
        %v681 = vpop.f32.mrb[0].mxu0
        %v682 = vadd.f32 0.0, %v681
        %v683 = vpop.f32.mrb[0].mxu0
        %v684 = vadd.f32 0.0, %v683
        %v685 = vpop.f32.mrb[0].mxu0
        %v686 = vadd.f32 0.0, %v685
        %v687 = vpop.f32.mrb[0].mxu0
        %v688 = vadd.f32 0.0, %v687
        %689 = vmatprep.mubr.bf16.mxu0 0
        %690 = vmatmul.mubr.bf16.gmra.mrb[0].mxu0 %v599
        %v691 = vpop.f32.mrb[0].mxu0
        %v692 = vadd.f32 0.0, %v691
        %v693 = vpop.f32.mrb[0].mxu0
        %v694 = vadd.f32 0.0, %v693
        %v695 = vpop.f32.mrb[0].mxu0
        %v696 = vadd.f32 0.0, %v695
        %v697 = vpop.f32.mrb[0].mxu0
        %v698 = vadd.f32 0.0, %v697
        %699 = vmatprep.mubr.bf16.mxu0 0
        %700 = vmatmul.mubr.bf16.gmra.mrb[0].mxu0 %v602
        %v701 = vpop.f32.mrb[0].mxu0
        %v702 = vadd.f32 0.0, %v701
        %v703 = vpop.f32.mrb[0].mxu0
        %v704 = vadd.f32 0.0, %v703
        %v705 = vpop.f32.mrb[0].mxu0
        %v706 = vadd.f32 0.0, %v705
        %v707 = vpop.f32.mrb[0].mxu0
        %v708 = vadd.f32 0.0, %v707
        %709 = vmatprep.mubr.bf16.mxu0 0
        %710 = vmatmul.mubr.bf16.gmra.mrb[0].mxu0 %v605
        %v711 = vpop.f32.mrb[0].mxu0
        %v712 = vadd.f32 0.0, %v711
        %v713 = vpop.f32.mrb[0].mxu0
        %v714 = vadd.f32 0.0, %v713
        %v715 = vpop.f32.mrb[0].mxu0
        %v716 = vadd.f32 0.0, %v715
        %v717 = vpop.f32.mrb[0].mxu0
        %v718 = vadd.f32 0.0, %v717
        %719 = vdwg.mxu0
        %v720 = vpack.c.bf16 %v646, %v642
        %v721 = vpack.c.bf16 %v648, %v644
        %v722 = vpack.c.bf16 %v656, %v652
        %v723 = vpack.c.bf16 %v658, %v654
        %v724 = vpack.c.bf16 %v666, %v662
        %v725 = vpack.c.bf16 %v668, %v664
        %v726 = vpack.c.bf16 %v676, %v672
        %v727 = vpack.c.bf16 %v678, %v674
        %v728 = vpack.c.bf16 %v686, %v682
        %v729 = vpack.c.bf16 %v688, %v684
        %v730 = vpack.c.bf16 %v696, %v692
        %v731 = vpack.c.bf16 %v698, %v694
        %v732 = vpack.c.bf16 %v706, %v702
        %v733 = vpack.c.bf16 %v708, %v704
        %v734 = vpack.c.bf16 %v716, %v712
        %v735 = vpack.c.bf16 %v718, %v714
        %736 = vst [vmem:[#allocation2 + $0x10] sm:$0xff] %v720
        %737 = vst [vmem:[#allocation2 + $0x18] sm:$0xff] %v721
        %738 = vst [vmem:[#allocation2 + $0x30] sm:$0xff] %v722
        %739 = vst [vmem:[#allocation2 + $0x38] sm:$0xff] %v723
        %740 = vst [vmem:[#allocation2 + $0x50] sm:$0xff] %v724
        %741 = vst [vmem:[#allocation2 + $0x58] sm:$0xff] %v725
        %742 = vst [vmem:[#allocation2 + $0x70] sm:$0xff] %v726
        %743 = vst [vmem:[#allocation2 + $0x78] sm:$0xff] %v727
        %744 = vst [vmem:[#allocation2 + $0x90] sm:$0xff] %v728
        %745 = vst [vmem:[#allocation2 + $0x98] sm:$0xff] %v729
        %746 = vst [vmem:[#allocation2 + $0xb0] sm:$0xff] %v730
        %747 = vst [vmem:[#allocation2 + $0xb8] sm:$0xff] %v731
        %748 = vst [vmem:[#allocation2 + $0xd0] sm:$0xff] %v732
        %749 = vst [vmem:[#allocation2 + $0xd8] sm:$0xff] %v733
        %750 = vst [vmem:[#allocation2 + $0xf0] sm:$0xff] %v734
        %751 = vst [vmem:[#allocation2 + $0xf8] sm:$0xff] %v735
        %v752 = vld [vmem:[#allocation2] sm:$0xff]
        %v753 = vld [vmem:[#allocation2 + $0x8] sm:$0xff]
        %v754 = vld [vmem:[#allocation2 + $0x10] sm:$0xff]
        %v755 = vld [vmem:[#allocation2 + $0x18] sm:$0xff]
        %v756 = vld [vmem:[#allocation2 + $0x20] sm:$0xff]
        %v757 = vld [vmem:[#allocation2 + $0x28] sm:$0xff]
        %v758 = vld [vmem:[#allocation2 + $0x30] sm:$0xff]
        %v759 = vld [vmem:[#allocation2 + $0x38] sm:$0xff]
        %v760 = vld [vmem:[#allocation2 + $0x40] sm:$0xff]
        %v761 = vld [vmem:[#allocation2 + $0x48] sm:$0xff]
        %v762 = vld [vmem:[#allocation2 + $0x50] sm:$0xff]
        %v763 = vld [vmem:[#allocation2 + $0x58] sm:$0xff]
        %v764 = vld [vmem:[#allocation2 + $0x60] sm:$0xff]
        %v765 = vld [vmem:[#allocation2 + $0x68] sm:$0xff]
        %v766 = vld [vmem:[#allocation2 + $0x70] sm:$0xff]
        %v767 = vld [vmem:[#allocation2 + $0x78] sm:$0xff]
        %v768 = vld [vmem:[#allocation2 + $0x80] sm:$0xff]
        %v769 = vld [vmem:[#allocation2 + $0x88] sm:$0xff]
        %v770 = vld [vmem:[#allocation2 + $0x90] sm:$0xff]
        %v771 = vld [vmem:[#allocation2 + $0x98] sm:$0xff]
        %v772 = vld [vmem:[#allocation2 + $0xa0] sm:$0xff]
        %v773 = vld [vmem:[#allocation2 + $0xa8] sm:$0xff]
        %v774 = vld [vmem:[#allocation2 + $0xb0] sm:$0xff]
        %v775 = vld [vmem:[#allocation2 + $0xb8] sm:$0xff]
        %v776 = vld [vmem:[#allocation2 + $0xc0] sm:$0xff]
        %v777 = vld [vmem:[#allocation2 + $0xc8] sm:$0xff]
        %v778 = vld [vmem:[#allocation2 + $0xd0] sm:$0xff]
        %v779 = vld [vmem:[#allocation2 + $0xd8] sm:$0xff]
        %v780 = vld [vmem:[#allocation2 + $0xe0] sm:$0xff]
        %v781 = vld [vmem:[#allocation2 + $0xe8] sm:$0xff]
        %v782 = vld [vmem:[#allocation2 + $0xf0] sm:$0xff]
        %v783 = vld [vmem:[#allocation2 + $0xf8] sm:$0xff]
        %v784 = vld [vmem:[#allocation3] sm:$0xff]
        %v785 = vld [vmem:[#allocation3 + $0x8] sm:$0xff]
        %v786 = vld [vmem:[#allocation3 + $0x10] sm:$0xff]
        %v787 = vld [vmem:[#allocation3 + $0x18] sm:$0xff]
        %v788 = vld [vmem:[#allocation3 + $0x20] sm:$0xff]
        %v789 = vld [vmem:[#allocation3 + $0x28] sm:$0xff]
        %v790 = vld [vmem:[#allocation3 + $0x30] sm:$0xff]
        %v791 = vld [vmem:[#allocation3 + $0x38] sm:$0xff]
        %v792 = vld [vmem:[#allocation3 + $0x40] sm:$0xff]
        %v793 = vld [vmem:[#allocation3 + $0x48] sm:$0xff]
        %v794 = vld [vmem:[#allocation3 + $0x50] sm:$0xff]
        %v795 = vld [vmem:[#allocation3 + $0x58] sm:$0xff]
        %v796 = vld [vmem:[#allocation3 + $0x60] sm:$0xff]
        %v797 = vld [vmem:[#allocation3 + $0x68] sm:$0xff]
        %v798 = vld [vmem:[#allocation3 + $0x70] sm:$0xff]
        %v799 = vld [vmem:[#allocation3 + $0x78] sm:$0xff]
        %v800 = vld [vmem:[#allocation3 + $0x80] sm:$0xff]
        %v801 = vld [vmem:[#allocation3 + $0x88] sm:$0xff]
        %v802 = vld [vmem:[#allocation3 + $0x90] sm:$0xff]
        %v803 = vld [vmem:[#allocation3 + $0x98] sm:$0xff]
        %v804 = vld [vmem:[#allocation3 + $0xa0] sm:$0xff]
        %v805 = vld [vmem:[#allocation3 + $0xa8] sm:$0xff]
        %v806 = vld [vmem:[#allocation3 + $0xb0] sm:$0xff]
        %v807 = vld [vmem:[#allocation3 + $0xb8] sm:$0xff]
        %v808 = vld [vmem:[#allocation3 + $0xc0] sm:$0xff]
        %v809 = vld [vmem:[#allocation3 + $0xc8] sm:$0xff]
        %v810 = vld [vmem:[#allocation3 + $0xd0] sm:$0xff]
        %v811 = vld [vmem:[#allocation3 + $0xd8] sm:$0xff]
        %v812 = vld [vmem:[#allocation3 + $0xe0] sm:$0xff]
        %v813 = vld [vmem:[#allocation3 + $0xe8] sm:$0xff]
        %v814 = vld [vmem:[#allocation3 + $0xf0] sm:$0xff]
        %v815 = vld [vmem:[#allocation3 + $0xf8] sm:$0xff]
        %v816 = vld [vmem:[#allocation3 + $0x100] sm:$0xff]
        %v817 = vld [vmem:[#allocation3 + $0x108] sm:$0xff]
        %v818 = vld [vmem:[#allocation3 + $0x110] sm:$0xff]
        %v819 = vld [vmem:[#allocation3 + $0x118] sm:$0xff]
        %v820 = vld [vmem:[#allocation3 + $0x120] sm:$0xff]
        %v821 = vld [vmem:[#allocation3 + $0x128] sm:$0xff]
        %v822 = vld [vmem:[#allocation3 + $0x130] sm:$0xff]
        %v823 = vld [vmem:[#allocation3 + $0x138] sm:$0xff]
        %v824 = vld [vmem:[#allocation3 + $0x140] sm:$0xff]
        %v825 = vld [vmem:[#allocation3 + $0x148] sm:$0xff]
        %v826 = vld [vmem:[#allocation3 + $0x150] sm:$0xff]
        %v827 = vld [vmem:[#allocation3 + $0x158] sm:$0xff]
        %v828 = vld [vmem:[#allocation3 + $0x160] sm:$0xff]
        %v829 = vld [vmem:[#allocation3 + $0x168] sm:$0xff]
        %v830 = vld [vmem:[#allocation3 + $0x170] sm:$0xff]
        %v831 = vld [vmem:[#allocation3 + $0x178] sm:$0xff]
        %v832 = vld [vmem:[#allocation3 + $0x180] sm:$0xff]
        %v833 = vld [vmem:[#allocation3 + $0x188] sm:$0xff]
        %v834 = vld [vmem:[#allocation3 + $0x190] sm:$0xff]
        %v835 = vld [vmem:[#allocation3 + $0x198] sm:$0xff]
        %v836 = vld [vmem:[#allocation3 + $0x1a0] sm:$0xff]
        %v837 = vld [vmem:[#allocation3 + $0x1a8] sm:$0xff]
        %v838 = vld [vmem:[#allocation3 + $0x1b0] sm:$0xff]
        %v839 = vld [vmem:[#allocation3 + $0x1b8] sm:$0xff]
        %v840 = vld [vmem:[#allocation3 + $0x1c0] sm:$0xff]
        %v841 = vld [vmem:[#allocation3 + $0x1c8] sm:$0xff]
        %v842 = vld [vmem:[#allocation3 + $0x1d0] sm:$0xff]
        %v843 = vld [vmem:[#allocation3 + $0x1d8] sm:$0xff]
        %v844 = vld [vmem:[#allocation3 + $0x1e0] sm:$0xff]
        %v845 = vld [vmem:[#allocation3 + $0x1e8] sm:$0xff]
        %v846 = vld [vmem:[#allocation3 + $0x1f0] sm:$0xff]
        %v847 = vld [vmem:[#allocation3 + $0x1f8] sm:$0xff]
        %v848 = vld [vmem:[%s3] sm:$0x3]
        %v850 = vlaneseq
        %v851 = vshrl.u32 %v850, 7
        %v852 = vsub.s32 0, %v851
        %v853 = vrot.slane %v848, %v852
        %v854 = vlaneseq
        %v855 = vshrl.u32 %v854, 7
        %v856 = vsub.s32 1, %v855
        %v857 = vrot.slane %v848, %v856
        %v924 = vunpack.c.l.b16 %v784
        %v925 = vunpack.c.h.b16 %v784
        %v926 = vunpack.c.l.b16 %v785
        %v927 = vunpack.c.h.b16 %v785
        %v928 = vunpack.c.l.b16 %v786
        %v929 = vunpack.c.h.b16 %v786
        %v930 = vunpack.c.l.b16 %v787
        %v931 = vunpack.c.h.b16 %v787
        %v932 = vunpack.c.l.b16 %v788
        %v933 = vunpack.c.h.b16 %v788
        %v934 = vunpack.c.l.b16 %v789
        %v935 = vunpack.c.h.b16 %v789
        %v936 = vunpack.c.l.b16 %v790
        %v937 = vunpack.c.h.b16 %v790
        %v938 = vunpack.c.l.b16 %v791
        %v939 = vunpack.c.h.b16 %v791
        %v940 = vunpack.c.l.b16 %v792
        %v941 = vunpack.c.h.b16 %v792
        %v942 = vunpack.c.l.b16 %v793
        %v943 = vunpack.c.h.b16 %v793
        %v944 = vunpack.c.l.b16 %v794
        %v945 = vunpack.c.h.b16 %v794
        %v946 = vunpack.c.l.b16 %v795
        %v947 = vunpack.c.h.b16 %v795
        %v948 = vunpack.c.l.b16 %v796
        %v949 = vunpack.c.h.b16 %v796
        %v950 = vunpack.c.l.b16 %v797
        %v951 = vunpack.c.h.b16 %v797
        %v952 = vunpack.c.l.b16 %v798
        %v953 = vunpack.c.h.b16 %v798
        %v954 = vunpack.c.l.b16 %v799
        %v955 = vunpack.c.h.b16 %v799
        %v956 = vunpack.c.l.b16 %v800
        %v957 = vunpack.c.h.b16 %v800
        %v958 = vunpack.c.l.b16 %v801
        %v959 = vunpack.c.h.b16 %v801
        %v960 = vunpack.c.l.b16 %v802
        %v961 = vunpack.c.h.b16 %v802
        %v962 = vunpack.c.l.b16 %v803
        %v963 = vunpack.c.h.b16 %v803
        %v964 = vunpack.c.l.b16 %v804
        %v965 = vunpack.c.h.b16 %v804
        %v966 = vunpack.c.l.b16 %v805
        %v967 = vunpack.c.h.b16 %v805
        %v968 = vunpack.c.l.b16 %v806
        %v969 = vunpack.c.h.b16 %v806
        %v970 = vunpack.c.l.b16 %v807
        %v971 = vunpack.c.h.b16 %v807
        %v972 = vunpack.c.l.b16 %v808
        %v973 = vunpack.c.h.b16 %v808
        %v974 = vunpack.c.l.b16 %v809
        %v975 = vunpack.c.h.b16 %v809
        %v976 = vunpack.c.l.b16 %v810
        %v977 = vunpack.c.h.b16 %v810
        %v978 = vunpack.c.l.b16 %v811
        %v979 = vunpack.c.h.b16 %v811
        %v980 = vunpack.c.l.b16 %v812
        %v981 = vunpack.c.h.b16 %v812
        %v982 = vunpack.c.l.b16 %v813
        %v983 = vunpack.c.h.b16 %v813
        %v984 = vunpack.c.l.b16 %v814
        %v985 = vunpack.c.h.b16 %v814
        %v986 = vunpack.c.l.b16 %v815
        %v987 = vunpack.c.h.b16 %v815
        %v988 = vunpack.c.l.b16 %v816
        %v989 = vunpack.c.h.b16 %v816
        %v990 = vunpack.c.l.b16 %v817
        %v991 = vunpack.c.h.b16 %v817
        %v992 = vunpack.c.l.b16 %v818
        %v993 = vunpack.c.h.b16 %v818
        %v994 = vunpack.c.l.b16 %v819
        %v995 = vunpack.c.h.b16 %v819
        %v996 = vunpack.c.l.b16 %v820
        %v997 = vunpack.c.h.b16 %v820
        %v998 = vunpack.c.l.b16 %v821
        %v999 = vunpack.c.h.b16 %v821
        %v1000 = vunpack.c.l.b16 %v822
        %v1001 = vunpack.c.h.b16 %v822
        %v1002 = vunpack.c.l.b16 %v823
        %v1003 = vunpack.c.h.b16 %v823
        %v1004 = vunpack.c.l.b16 %v824
        %v1005 = vunpack.c.h.b16 %v824
        %v1006 = vunpack.c.l.b16 %v825
        %v1007 = vunpack.c.h.b16 %v825
        %v1008 = vunpack.c.l.b16 %v826
        %v1009 = vunpack.c.h.b16 %v826
        %v1010 = vunpack.c.l.b16 %v827
        %v1011 = vunpack.c.h.b16 %v827
        %v1012 = vunpack.c.l.b16 %v828
        %v1013 = vunpack.c.h.b16 %v828
        %v1014 = vunpack.c.l.b16 %v829
        %v1015 = vunpack.c.h.b16 %v829
        %v1016 = vunpack.c.l.b16 %v830
        %v1017 = vunpack.c.h.b16 %v830
        %v1018 = vunpack.c.l.b16 %v831
        %v1019 = vunpack.c.h.b16 %v831
        %v1020 = vunpack.c.l.b16 %v832
        %v1021 = vunpack.c.h.b16 %v832
        %v1022 = vunpack.c.l.b16 %v833
        %v1023 = vunpack.c.h.b16 %v833
        %v1024 = vunpack.c.l.b16 %v834
        %v1025 = vunpack.c.h.b16 %v834
        %v1026 = vunpack.c.l.b16 %v835
        %v1027 = vunpack.c.h.b16 %v835
        %v1028 = vunpack.c.l.b16 %v836
        %v1029 = vunpack.c.h.b16 %v836
        %v1030 = vunpack.c.l.b16 %v837
        %v1031 = vunpack.c.h.b16 %v837
        %v1032 = vunpack.c.l.b16 %v838
        %v1033 = vunpack.c.h.b16 %v838
        %v1034 = vunpack.c.l.b16 %v839
        %v1035 = vunpack.c.h.b16 %v839
        %v1036 = vunpack.c.l.b16 %v840
        %v1037 = vunpack.c.h.b16 %v840
        %v1038 = vunpack.c.l.b16 %v841
        %v1039 = vunpack.c.h.b16 %v841
        %v1040 = vunpack.c.l.b16 %v842
        %v1041 = vunpack.c.h.b16 %v842
        %v1042 = vunpack.c.l.b16 %v843
        %v1043 = vunpack.c.h.b16 %v843
        %v1044 = vunpack.c.l.b16 %v844
        %v1045 = vunpack.c.h.b16 %v844
        %v1046 = vunpack.c.l.b16 %v845
        %v1047 = vunpack.c.h.b16 %v845
        %v1048 = vunpack.c.l.b16 %v846
        %v1049 = vunpack.c.h.b16 %v846
        %v1050 = vunpack.c.l.b16 %v847
        %v1051 = vunpack.c.h.b16 %v847
        %v1052 = vpack.c.b16 %v926, %v924
        %v1053 = vpack.c.b16 %v927, %v925
        %v1054 = vpack.c.b16 %v930, %v928
        %v1055 = vpack.c.b16 %v931, %v929
        %v1056 = vpack.c.b16 %v934, %v932
        %v1057 = vpack.c.b16 %v935, %v933
        %v1058 = vpack.c.b16 %v938, %v936
        %v1059 = vpack.c.b16 %v939, %v937
        %v1060 = vpack.c.b16 %v942, %v940
        %v1061 = vpack.c.b16 %v943, %v941
        %v1062 = vpack.c.b16 %v946, %v944
        %v1063 = vpack.c.b16 %v947, %v945
        %v1064 = vpack.c.b16 %v950, %v948
        %v1065 = vpack.c.b16 %v951, %v949
        %v1066 = vpack.c.b16 %v954, %v952
        %v1067 = vpack.c.b16 %v955, %v953
        %v1068 = vpack.c.b16 %v958, %v956
        %v1069 = vpack.c.b16 %v959, %v957
        %v1070 = vpack.c.b16 %v962, %v960
        %v1071 = vpack.c.b16 %v963, %v961
        %v1072 = vpack.c.b16 %v966, %v964
        %v1073 = vpack.c.b16 %v967, %v965
        %v1074 = vpack.c.b16 %v970, %v968
        %v1075 = vpack.c.b16 %v971, %v969
        %v1076 = vpack.c.b16 %v974, %v972
        %v1077 = vpack.c.b16 %v975, %v973
        %v1078 = vpack.c.b16 %v978, %v976
        %v1079 = vpack.c.b16 %v979, %v977
        %v1080 = vpack.c.b16 %v982, %v980
        %v1081 = vpack.c.b16 %v983, %v981
        %v1082 = vpack.c.b16 %v986, %v984
        %v1083 = vpack.c.b16 %v987, %v985
        %v1084 = vpack.c.b16 %v990, %v988
        %v1085 = vpack.c.b16 %v991, %v989
        %v1086 = vpack.c.b16 %v994, %v992
        %v1087 = vpack.c.b16 %v995, %v993
        %v1088 = vpack.c.b16 %v998, %v996
        %v1089 = vpack.c.b16 %v999, %v997
        %v1090 = vpack.c.b16 %v1002, %v1000
        %v1091 = vpack.c.b16 %v1003, %v1001
        %v1092 = vpack.c.b16 %v1006, %v1004
        %v1093 = vpack.c.b16 %v1007, %v1005
        %v1094 = vpack.c.b16 %v1010, %v1008
        %v1095 = vpack.c.b16 %v1011, %v1009
        %v1096 = vpack.c.b16 %v1014, %v1012
        %v1097 = vpack.c.b16 %v1015, %v1013
        %v1098 = vpack.c.b16 %v1018, %v1016
        %v1099 = vpack.c.b16 %v1019, %v1017
        %v1100 = vpack.c.b16 %v1022, %v1020
        %v1101 = vpack.c.b16 %v1023, %v1021
        %v1102 = vpack.c.b16 %v1026, %v1024
        %v1103 = vpack.c.b16 %v1027, %v1025
        %v1104 = vpack.c.b16 %v1030, %v1028
        %v1105 = vpack.c.b16 %v1031, %v1029
        %v1106 = vpack.c.b16 %v1034, %v1032
        %v1107 = vpack.c.b16 %v1035, %v1033
        %v1108 = vpack.c.b16 %v1038, %v1036
        %v1109 = vpack.c.b16 %v1039, %v1037
        %v1110 = vpack.c.b16 %v1042, %v1040
        %v1111 = vpack.c.b16 %v1043, %v1041
        %v1112 = vpack.c.b16 %v1046, %v1044
        %v1113 = vpack.c.b16 %v1047, %v1045
        %v1114 = vpack.c.b16 %v1050, %v1048
        %v1115 = vpack.c.b16 %v1051, %v1049
        %1180 = vmatprep.subr.bf16.mxu0 %v1053
        %1181 = vmatpush1.bf16.msra.mxu0 %v1052
        %1182 = vmatprep.subr.bf16.mxu0 %v1055
        %1183 = vmatpush1.bf16.msra.mxu0 %v1054
        %1184 = vmatprep.subr.bf16.mxu0 %v1057
        %1185 = vmatpush1.bf16.msra.mxu0 %v1056
        %1186 = vmatprep.subr.bf16.mxu0 %v1059
        %1187 = vmatpush1.bf16.msra.mxu0 %v1058
        %1188 = vmatprep.subr.bf16.mxu0 %v1061
        %1189 = vmatpush1.bf16.msra.mxu0 %v1060
        %1190 = vmatprep.subr.bf16.mxu0 %v1063
        %1191 = vmatpush1.bf16.msra.mxu0 %v1062
        %1192 = vmatprep.subr.bf16.mxu0 %v1065
        %1193 = vmatpush1.bf16.msra.mxu0 %v1064
        %1194 = vmatprep.subr.bf16.mxu0 %v1067
        %1195 = vmatpush1.bf16.msra.mxu0 %v1066
        %1196 = vmatprep.subr.bf16.mxu0 %v1069
        %1197 = vmatpush1.bf16.msra.mxu0 %v1068
        %1198 = vmatprep.subr.bf16.mxu0 %v1071
        %1199 = vmatpush1.bf16.msra.mxu0 %v1070
        %1200 = vmatprep.subr.bf16.mxu0 %v1073
        %1201 = vmatpush1.bf16.msra.mxu0 %v1072
        %1202 = vmatprep.subr.bf16.mxu0 %v1075
        %1203 = vmatpush1.bf16.msra.mxu0 %v1074
        %1204 = vmatprep.subr.bf16.mxu0 %v1077
        %1205 = vmatpush1.bf16.msra.mxu0 %v1076
        %1206 = vmatprep.subr.bf16.mxu0 %v1079
        %1207 = vmatpush1.bf16.msra.mxu0 %v1078
        %1208 = vmatprep.subr.bf16.mxu0 %v1081
        %1209 = vmatpush1.bf16.msra.mxu0 %v1080
        %1210 = vmatprep.subr.bf16.mxu0 %v1083
        %1211 = vmatpush1.bf16.msra.mxu0 %v1082
        %1212 = vmatprep.mubr.bf16.mxu0 %v753
        %1213 = vmatmul.mubr.bf16.gmra.mrb[0].mxu0 %v752
        %v1214 = vpop.f32.mrb[0].mxu0
        %v1215 = vadd.f32 %v853, %v1214
        %v1216 = vpop.f32.mrb[0].mxu0
        %v1217 = vadd.f32 %v857, %v1216
        %v1218 = vpop.f32.mrb[0].mxu0
        %v1219 = vadd.f32 %v853, %v1218
        %v1220 = vpop.f32.mrb[0].mxu0
        %v1221 = vadd.f32 %v857, %v1220
        %1222 = vmatprep.mubr.bf16.mxu0 %v757
        %1223 = vmatmul.mubr.bf16.gmra.mrb[0].mxu0 %v756
        %v1224 = vpop.f32.mrb[0].mxu0
        %v1225 = vadd.f32 %v853, %v1224
        %v1226 = vpop.f32.mrb[0].mxu0
        %v1227 = vadd.f32 %v857, %v1226
        %v1228 = vpop.f32.mrb[0].mxu0
        %v1229 = vadd.f32 %v853, %v1228
        %v1230 = vpop.f32.mrb[0].mxu0
        %v1231 = vadd.f32 %v857, %v1230
        %1232 = vmatprep.mubr.bf16.mxu0 %v761
        %1233 = vmatmul.mubr.bf16.gmra.mrb[0].mxu0 %v760
        %v1234 = vpop.f32.mrb[0].mxu0
        %v1235 = vadd.f32 %v853, %v1234
        %v1236 = vpop.f32.mrb[0].mxu0
        %v1237 = vadd.f32 %v857, %v1236
        %v1238 = vpop.f32.mrb[0].mxu0
        %v1239 = vadd.f32 %v853, %v1238
        %v1240 = vpop.f32.mrb[0].mxu0
        %v1241 = vadd.f32 %v857, %v1240
        %1242 = vmatprep.mubr.bf16.mxu0 %v765
        %1243 = vmatmul.mubr.bf16.gmra.mrb[0].mxu0 %v764
        %v1244 = vpop.f32.mrb[0].mxu0
        %v1245 = vadd.f32 %v853, %v1244
        %v1246 = vpop.f32.mrb[0].mxu0
        %v1247 = vadd.f32 %v857, %v1246
        %v1248 = vpop.f32.mrb[0].mxu0
        %v1249 = vadd.f32 %v853, %v1248
        %v1250 = vpop.f32.mrb[0].mxu0
        %v1251 = vadd.f32 %v857, %v1250
        %1252 = vmatprep.mubr.bf16.mxu0 %v769
        %1253 = vmatmul.mubr.bf16.gmra.mrb[0].mxu0 %v768
        %v1254 = vpop.f32.mrb[0].mxu0
        %v1255 = vadd.f32 %v853, %v1254
        %v1256 = vpop.f32.mrb[0].mxu0
        %v1257 = vadd.f32 %v857, %v1256
        %v1258 = vpop.f32.mrb[0].mxu0
        %v1259 = vadd.f32 %v853, %v1258
        %v1260 = vpop.f32.mrb[0].mxu0
        %v1261 = vadd.f32 %v857, %v1260
        %1262 = vmatprep.mubr.bf16.mxu0 %v773
        %1263 = vmatmul.mubr.bf16.gmra.mrb[0].mxu0 %v772
        %v1264 = vpop.f32.mrb[0].mxu0
        %v1265 = vadd.f32 %v853, %v1264
        %v1266 = vpop.f32.mrb[0].mxu0
        %v1267 = vadd.f32 %v857, %v1266
        %v1268 = vpop.f32.mrb[0].mxu0
        %v1269 = vadd.f32 %v853, %v1268
        %v1270 = vpop.f32.mrb[0].mxu0
        %v1271 = vadd.f32 %v857, %v1270
        %1272 = vmatprep.mubr.bf16.mxu0 %v777
        %1273 = vmatmul.mubr.bf16.gmra.mrb[0].mxu0 %v776
        %v1274 = vpop.f32.mrb[0].mxu0
        %v1275 = vadd.f32 %v853, %v1274
        %v1276 = vpop.f32.mrb[0].mxu0
        %v1277 = vadd.f32 %v857, %v1276
        %v1278 = vpop.f32.mrb[0].mxu0
        %v1279 = vadd.f32 %v853, %v1278
        %v1280 = vpop.f32.mrb[0].mxu0
        %v1281 = vadd.f32 %v857, %v1280
        %1282 = vmatprep.mubr.bf16.mxu0 %v781
        %1283 = vmatmul.mubr.bf16.gmra.mrb[0].mxu0 %v780
        %v1284 = vpop.f32.mrb[0].mxu0
        %v1285 = vadd.f32 %v853, %v1284
        %v1286 = vpop.f32.mrb[0].mxu0
        %v1287 = vadd.f32 %v857, %v1286
        %v1288 = vpop.f32.mrb[0].mxu0
        %v1289 = vadd.f32 %v853, %v1288
        %v1290 = vpop.f32.mrb[0].mxu0
        %v1291 = vadd.f32 %v857, %v1290
        %1292 = vdwg.mxu0
        %1293 = vmatprep.subr.bf16.mxu0 %v1085
        %1294 = vmatpush1.bf16.msra.mxu0 %v1084
        %1295 = vmatprep.subr.bf16.mxu0 %v1087
        %1296 = vmatpush1.bf16.msra.mxu0 %v1086
        %1297 = vmatprep.subr.bf16.mxu0 %v1089
        %1298 = vmatpush1.bf16.msra.mxu0 %v1088
        %1299 = vmatprep.subr.bf16.mxu0 %v1091
        %1300 = vmatpush1.bf16.msra.mxu0 %v1090
        %1301 = vmatprep.subr.bf16.mxu0 %v1093
        %1302 = vmatpush1.bf16.msra.mxu0 %v1092
        %1303 = vmatprep.subr.bf16.mxu0 %v1095
        %1304 = vmatpush1.bf16.msra.mxu0 %v1094
        %1305 = vmatprep.subr.bf16.mxu0 %v1097
        %1306 = vmatpush1.bf16.msra.mxu0 %v1096
        %1307 = vmatprep.subr.bf16.mxu0 %v1099
        %1308 = vmatpush1.bf16.msra.mxu0 %v1098
        %1309 = vmatprep.subr.bf16.mxu0 %v1101
        %1310 = vmatpush1.bf16.msra.mxu0 %v1100
        %1311 = vmatprep.subr.bf16.mxu0 %v1103
        %1312 = vmatpush1.bf16.msra.mxu0 %v1102
        %1313 = vmatprep.subr.bf16.mxu0 %v1105
        %1314 = vmatpush1.bf16.msra.mxu0 %v1104
        %1315 = vmatprep.subr.bf16.mxu0 %v1107
        %1316 = vmatpush1.bf16.msra.mxu0 %v1106
        %1317 = vmatprep.subr.bf16.mxu0 %v1109
        %1318 = vmatpush1.bf16.msra.mxu0 %v1108
        %1319 = vmatprep.subr.bf16.mxu0 %v1111
        %1320 = vmatpush1.bf16.msra.mxu0 %v1110
        %1321 = vmatprep.subr.bf16.mxu0 %v1113
        %1322 = vmatpush1.bf16.msra.mxu0 %v1112
        %1323 = vmatprep.subr.bf16.mxu0 %v1115
        %1324 = vmatpush1.bf16.msra.mxu0 %v1114
        %1325 = vmatprep.mubr.bf16.mxu0 %v755
        %1326 = vmatmul.mubr.bf16.gmra.mrb[0].mxu0 %v754
        %v1327 = vpop.f32.mrb[0].mxu0
        %v1328 = vadd.f32 %v1215, %v1327
        %v1329 = vpop.f32.mrb[0].mxu0
        %v1330 = vadd.f32 %v1217, %v1329
        %v1331 = vpop.f32.mrb[0].mxu0
        %v1332 = vadd.f32 %v1219, %v1331
        %v1333 = vpop.f32.mrb[0].mxu0
        %v1334 = vadd.f32 %v1221, %v1333
        %1335 = vmatprep.mubr.bf16.mxu0 %v759
        %1336 = vmatmul.mubr.bf16.gmra.mrb[0].mxu0 %v758
        %v1337 = vpop.f32.mrb[0].mxu0
        %v1338 = vadd.f32 %v1225, %v1337
        %v1339 = vpop.f32.mrb[0].mxu0
        %v1340 = vadd.f32 %v1227, %v1339
        %v1341 = vpop.f32.mrb[0].mxu0
        %v1342 = vadd.f32 %v1229, %v1341
        %v1343 = vpop.f32.mrb[0].mxu0
        %v1344 = vadd.f32 %v1231, %v1343
        %1345 = vmatprep.mubr.bf16.mxu0 %v763
        %1346 = vmatmul.mubr.bf16.gmra.mrb[0].mxu0 %v762
        %v1347 = vpop.f32.mrb[0].mxu0
        %v1348 = vadd.f32 %v1235, %v1347
        %v1349 = vpop.f32.mrb[0].mxu0
        %v1350 = vadd.f32 %v1237, %v1349
        %v1351 = vpop.f32.mrb[0].mxu0
        %v1352 = vadd.f32 %v1239, %v1351
        %v1353 = vpop.f32.mrb[0].mxu0
        %v1354 = vadd.f32 %v1241, %v1353
        %1355 = vmatprep.mubr.bf16.mxu0 %v767
        %1356 = vmatmul.mubr.bf16.gmra.mrb[0].mxu0 %v766
        %v1357 = vpop.f32.mrb[0].mxu0
        %v1358 = vadd.f32 %v1245, %v1357
        %v1359 = vpop.f32.mrb[0].mxu0
        %v1360 = vadd.f32 %v1247, %v1359
        %v1361 = vpop.f32.mrb[0].mxu0
        %v1362 = vadd.f32 %v1249, %v1361
        %v1363 = vpop.f32.mrb[0].mxu0
        %v1364 = vadd.f32 %v1251, %v1363
        %1365 = vmatprep.mubr.bf16.mxu0 %v771
        %1366 = vmatmul.mubr.bf16.gmra.mrb[0].mxu0 %v770
        %v1367 = vpop.f32.mrb[0].mxu0
        %v1368 = vadd.f32 %v1255, %v1367
        %v1369 = vpop.f32.mrb[0].mxu0
        %v1370 = vadd.f32 %v1257, %v1369
        %v1371 = vpop.f32.mrb[0].mxu0
        %v1372 = vadd.f32 %v1259, %v1371
        %v1373 = vpop.f32.mrb[0].mxu0
        %v1374 = vadd.f32 %v1261, %v1373
        %1375 = vmatprep.mubr.bf16.mxu0 %v775
        %1376 = vmatmul.mubr.bf16.gmra.mrb[0].mxu0 %v774
        %v1377 = vpop.f32.mrb[0].mxu0
        %v1378 = vadd.f32 %v1265, %v1377
        %v1379 = vpop.f32.mrb[0].mxu0
        %v1380 = vadd.f32 %v1267, %v1379
        %v1381 = vpop.f32.mrb[0].mxu0
        %v1382 = vadd.f32 %v1269, %v1381
        %v1383 = vpop.f32.mrb[0].mxu0
        %v1384 = vadd.f32 %v1271, %v1383
        %1385 = vmatprep.mubr.bf16.mxu0 %v779
        %1386 = vmatmul.mubr.bf16.gmra.mrb[0].mxu0 %v778
        %v1387 = vpop.f32.mrb[0].mxu0
        %v1388 = vadd.f32 %v1275, %v1387
        %v1389 = vpop.f32.mrb[0].mxu0
        %v1390 = vadd.f32 %v1277, %v1389
        %v1391 = vpop.f32.mrb[0].mxu0
        %v1392 = vadd.f32 %v1279, %v1391
        %v1393 = vpop.f32.mrb[0].mxu0
        %v1394 = vadd.f32 %v1281, %v1393
        %1395 = vmatprep.mubr.bf16.mxu0 %v783
        %1396 = vmatmul.mubr.bf16.gmra.mrb[0].mxu0 %v782
        %v1397 = vpop.f32.mrb[0].mxu0
        %v1398 = vadd.f32 %v1285, %v1397
        %v1399 = vpop.f32.mrb[0].mxu0
        %v1400 = vadd.f32 %v1287, %v1399
        %v1401 = vpop.f32.mrb[0].mxu0
        %v1402 = vadd.f32 %v1289, %v1401
        %v1403 = vpop.f32.mrb[0].mxu0
        %v1404 = vadd.f32 %v1291, %v1403
        %1405 = vdwg.mxu0
        %1406 = vst [vmem:[%s237] sm:$0xff] %v1328
        %1407 = vst [vmem:[%s237 + $0x8] sm:$0xff] %v1332
        %1408 = vst [vmem:[%s237 + $0x10] sm:$0xff] %v1338
        %1409 = vst [vmem:[%s237 + $0x18] sm:$0xff] %v1342
        %1410 = vst [vmem:[%s237 + $0x20] sm:$0xff] %v1348
        %1411 = vst [vmem:[%s237 + $0x28] sm:$0xff] %v1352
        %1412 = vst [vmem:[%s237 + $0x30] sm:$0xff] %v1358
        %1413 = vst [vmem:[%s237 + $0x38] sm:$0xff] %v1362
        %1414 = vst [vmem:[%s237 + $0x40] sm:$0xff] %v1368
        %1415 = vst [vmem:[%s237 + $0x48] sm:$0xff] %v1372
        %1416 = vst [vmem:[%s237 + $0x50] sm:$0xff] %v1378
        %1417 = vst [vmem:[%s237 + $0x58] sm:$0xff] %v1382
        %1418 = vst [vmem:[%s237 + $0x60] sm:$0xff] %v1388
        %1419 = vst [vmem:[%s237 + $0x68] sm:$0xff] %v1392
        %1420 = vst [vmem:[%s237 + $0x70] sm:$0xff] %v1398
        %1421 = vst [vmem:[%s237 + $0x78] sm:$0xff] %v1402
        %s1422 = scalar_lea.vmem %s237, 128 [#allocation6]
        %1423 = vst [vmem:[%s1422] sm:$0xff] %v1330
        %1424 = vst [vmem:[%s1422 + $0x8] sm:$0xff] %v1334
        %1425 = vst [vmem:[%s1422 + $0x10] sm:$0xff] %v1340
        %1426 = vst [vmem:[%s1422 + $0x18] sm:$0xff] %v1344
        %1427 = vst [vmem:[%s1422 + $0x20] sm:$0xff] %v1350
        %1428 = vst [vmem:[%s1422 + $0x28] sm:$0xff] %v1354
        %1429 = vst [vmem:[%s1422 + $0x30] sm:$0xff] %v1360
        %1430 = vst [vmem:[%s1422 + $0x38] sm:$0xff] %v1364
        %1431 = vst [vmem:[%s1422 + $0x40] sm:$0xff] %v1370
        %1432 = vst [vmem:[%s1422 + $0x48] sm:$0xff] %v1374
        %1433 = vst [vmem:[%s1422 + $0x50] sm:$0xff] %v1380
        %1434 = vst [vmem:[%s1422 + $0x58] sm:$0xff] %v1384
        %1435 = vst [vmem:[%s1422 + $0x60] sm:$0xff] %v1390
        %1436 = vst [vmem:[%s1422 + $0x68] sm:$0xff] %v1394
        %1437 = vst [vmem:[%s1422 + $0x70] sm:$0xff] %v1400
        %1438 = vst [vmem:[%s1422 + $0x78] sm:$0xff] %v1404
        %s1439 = sand.u32 %s135, 1
        %s1440 = scalar_lea.sflag [#allocation5], %s1439
        %s1441 = sand.u32 %s135, 1
        %s1442 = smul.addr %s1441, 256
        %s1443 = scalar_lea.vmem [#allocation6], %s1442
        // Predicated region
        $region41: #{tpu_custom_call.1} parent=35 // pred_check
          %p1444 = pneg %p145
        $region42: #{tpu_custom_call.1} parent=35 // pred_check_branch
          %1446 = sbr.rel (%p1444) target = $region44
        $region43: #{tpu_custom_call.1} parent=35 // pred_region
          %s1447 = smul.u32 16, %s24
          %s1449 = ssub.s32 4096, 4096
          %1450 = vsyncadd %s1440, %s1449
          %s1451 = smul.addr %s23, 32
          %s1452 = sadd.s32 %s1447, %s1451
          %s1453 = smul.addr %s1452, 128
          %s1454 = scalar_lea.hbm %s4, %s1453
          %s1455 = sshll.u32 %s1443, 4
          %s1456 = int_to_ptr.vmem [resolvable:$true] %s1455
          %1461 = dma.vmem_to_hbm [thread:$0]  %s1456, 4096, %s1454, %s1440, 128, 128, 8
        $region44: #{tpu_custom_call.1} parent=35 // pred_fallthru
          _
      $region36: #{tpu_custom_call.1} parent=5 // pred_fallthru
        _
      %p1462 = scmp.le.s32.totalorder 2, %s14
      // Predicated region
      $region45: #{tpu_custom_call.1} parent=5 // pred_check
        %p1463 = pneg %p1462
      $region46: #{tpu_custom_call.1} parent=5 // pred_check_branch
        %1465 = sbr.rel (%p1463) target = $region48
      $region47: #{tpu_custom_call.1} parent=5 // pred_region
        %s1466 = ssub.s32 %s14, 2
        // Predicated region
        $region49: #{tpu_custom_call.1} parent=47 // pred_check
          %p1467 = pneg %p151
        $region50: #{tpu_custom_call.1} parent=47 // pred_check_branch
          %1469 = sbr.rel (%p1467) target = $region52
        $region51: #{tpu_custom_call.1} parent=47 // pred_region
          %s1470 = sand.u32 %s136, 1
          %s1471 = scalar_lea.sflag [#allocation5], %s1470
          %s1472 = sand.u32 %s136, 1
          %s1473 = smul.addr %s1472, 256
          %s1474 = scalar_lea.vmem [#allocation6], %s1473
          %1475 = dma.done %s1471, 4096
        $region52: #{tpu_custom_call.1} parent=47 // pred_fallthru
          _
      $region48: #{tpu_custom_call.1} parent=5 // pred_fallthru
        _
    $region6: #{tpu_custom_call.1} parent=1 // loop_footer
      %s18 = sadd.s32 1, %s14
    $region7: #{tpu_custom_call.1} parent=1 // loop_footer_branch
      %13 = sbr.rel target = $region3
    $region8: #{tpu_custom_call.1} parent=1 // loop_exit
      _
    %1476 = vsyncpa [#allocation4], 1
    %s1477 = scalar_lea.sflag [#allocation4], 1
    %1478 = vsyncpa %s1477, 1
    %1479 = vsyncpa [#allocation5], 1
    %s1480 = scalar_lea.sflag [#allocation5], 1
    %1481 = vsyncpa %s1480, 1

</llo_original>
